<compile_context>
chip_gen: v7x
topology: tpu7x:2x2x1
jax: 0.10.0
libtpu: 0.0.40
codegen_flags: <defaults>
</compile_context>

<pallas_src>
import functools

import jax
import jax.numpy as jnp
from jax import lax
from jax.experimental import pallas as pl
from jax.experimental.pallas import tpu as pltpu


def _round_up(n, m):
    return ((n + m - 1) // m) * m


def _pad2d(a, rows, cols):
    """Zero-pad a 2-D array to [rows, cols] with lax.pad (no scatter)."""
    r, k = a.shape
    zero = jnp.array(0, a.dtype)
    return lax.pad(a, zero, ((0, rows - r, 0), (0, cols - k, 0)))


def pack_tower(params, c):
    """Pack [(W [in,out], b [out]), ...] into one bf16 [L*(c+16), c] slab.

    Each layer block is 16-sublane aligned: c rows of W (zero-padded to
    [c, c]) followed by a 16-row bias block (bias in row 0).  Called ONCE at
    init / parameter-update time, not per forward call.
    """
    blocks = []
    for (w, b) in params:
        fan_in, fan_out = w.shape
        w_pad = _pad2d(w.astype(jnp.float32), c, c)
        b_pad = _pad2d(b.reshape(1, -1).astype(jnp.float32), 16, c)
        blocks.append(jnp.concatenate([w_pad, b_pad], axis=0))
    return jnp.concatenate(blocks, axis=0).astype(jnp.bfloat16)


def _critic_kernel(num_linear, c, y_ref, x_ref, h_ref, g_ref, out_ref, hy_ref):
    """One (row-tile, col-tile) of scores = h(y) @ g(x)^T."""
    blk = c + 16  # rows per packed layer block: [W (c rows) | 16-row bias block]

    def tower(inp_ref, slab_ref):
        h = inp_ref[...]                                      # [T, C] bf16
        for i in range(num_linear):
            w = slab_ref[i * blk: i * blk + c, :]             # [C, C] bf16 (static)
            b = slab_ref[i * blk + c: i * blk + c + 1, :]     # [1, C] bf16 (static)
            z = jnp.dot(h, w, preferred_element_type=jnp.float32)
            z = z + b.astype(jnp.float32)                     # f32 accumulate + bias
            if i < num_linear - 1:
                z = jnp.maximum(z, 0.0)                       # ReLU
            h = z.astype(jnp.bfloat16)
        return h                                              # [T, C] bf16

    # h(y) tower only depends on the row-tile: compute once per row-tile and
    # cache in VMEM scratch across all column tiles of the serial j axis.
    @pl.when(pl.program_id(1) == 0)
    def _():
        hy_ref[...] = tower(y_ref, h_ref)

    gx = tower(x_ref, g_ref)                                  # [tn, C] bf16

    # scores tile = hy @ gx^T as an NT (last-axis/last-axis) contraction —
    # lowers straight to the MXU, no explicit transpose of gx.
    out_ref[...] = lax.dot_general(
        hy_ref[...], gx,
        dimension_numbers=(((1,), (1,)), ((), ())),
        preferred_element_type=jnp.float32,
    )


def separable_critic(x, y, g_slab, h_slab, *, tm=128, tn=128):
    """x: [Bx, dim], y: [By, dim], pre-packed bf16 slabs -> scores [By, Bx] f32."""
    c = g_slab.shape[1]
    blk = c + 16
    num_linear = g_slab.shape[0] // blk
    assert g_slab.shape == h_slab.shape == (num_linear * blk, c)

    Bx, dim = x.shape
    By, _ = y.shape
    bx_pad = _round_up(Bx, tn)   # lane-dense output last dim
    by_pad = _round_up(By, tm)

    x_pad = _pad2d(x.astype(jnp.bfloat16), bx_pad, c)
    y_pad = _pad2d(y.astype(jnp.bfloat16), by_pad, c)

    kernel = functools.partial(_critic_kernel, num_linear, c)

    # Resident footprint (double-buffered tiles + slabs + scratch) is < 2 MiB
    # at these tile sizes; 16 MiB fits every generation's scoped default.
    scores_pad = pl.pallas_call(
        kernel,
        out_shape=jax.ShapeDtypeStruct((by_pad, bx_pad), jnp.float32),
        grid_spec=pltpu.PrefetchScalarGridSpec(
            num_scalar_prefetch=0,
            grid=(by_pad // tm, bx_pad // tn),
            in_specs=[
                pl.BlockSpec((tm, c), lambda i, j: (i, 0)),              # y tile
                pl.BlockSpec((tn, c), lambda i, j: (j, 0)),              # x tile
                pl.BlockSpec((num_linear * blk, c), lambda i, j: (0, 0)),  # h slab
                pl.BlockSpec((num_linear * blk, c), lambda i, j: (0, 0)),  # g slab
            ],
            out_specs=pl.BlockSpec((tm, tn), lambda i, j: (i, j)),
            scratch_shapes=[pltpu.VMEM((tm, c), jnp.bfloat16)],          # cached h(y)
        ),
        compiler_params=pltpu.CompilerParams(
            dimension_semantics=("parallel", "arbitrary"),
            vmem_limit_bytes=16 * 1024 * 1024,
        ),
    )(y_pad, x_pad, h_slab, g_slab)

    # Padded rows/cols are MLP(0) (bias-only), NOT zero — must be sliced off.
    return scores_pad[:By, :Bx]


def init_mlp_params(key, dim, hidden_dim, output_dim, layers):
    """PyTorch-Linear-style init. Returns list of (W [in,out], b [out])."""
    sizes = [(dim, hidden_dim)] + [(hidden_dim, hidden_dim)] * layers + [(hidden_dim, output_dim)]
    params = []
    for (fan_in, fan_out) in sizes:
        key, kw, kb = jax.random.split(key, 3)
        bound = 1.0 / jnp.sqrt(fan_in)
        w = jax.random.uniform(kw, (fan_in, fan_out), jnp.float32, -bound, bound)
        b = jax.random.uniform(kb, (fan_out,), jnp.float32, -bound, bound)
        params.append((w, b))
    return params, key


def separable_critic_ref(x, y, g_params, h_params):
    """Pure-JAX f32 reference for correctness checking."""
    def mlp_apply(inp, params):
        h = inp
        for i, (w, b) in enumerate(params):
            h = h @ w + b
            if i < len(params) - 1:
                h = jnp.maximum(h, 0.0)
        return h
    return mlp_apply(y, h_params) @ mlp_apply(x, g_params).T


if __name__ == "__main__":
    # Module config: dim=16, hidden_dim=32, embed_dim=32, layers=1, activation='relu'
    dim, hidden_dim, embed_dim, layers = 16, 32, 32, 1
    batch = 8

    key = jax.random.PRNGKey(0)
    g_params, key = init_mlp_params(key, dim, hidden_dim, embed_dim, layers)
    h_params, key = init_mlp_params(key, dim, hidden_dim, embed_dim, layers)

    # Pack slabs ONCE (hoisted out of the per-call path, per perf review).
    feat_dims = [dim] + [w.shape[1] for (w, _) in g_params]
    c = _round_up(max(feat_dims), 128)
    g_slab = pack_tower(g_params, c)
    h_slab = pack_tower(h_params, c)

    key, kx, ky = jax.random.split(key, 3)
    x = jax.random.normal(kx, (batch, dim), jnp.float32)
    y = jax.random.normal(ky, (batch, dim), jnp.float32)

    fwd = jax.jit(separable_critic)
    scores = fwd(x, y, g_slab, h_slab)
    scores = jax.block_until_ready(scores)

    ref = separable_critic_ref(x, y, g_params, h_params)
    assert scores.shape == (batch, batch)
    # bf16 operands with f32 accumulation: loosened tolerance vs f32 reference.
    assert jnp.allclose(scores, ref, atol=6e-2, rtol=6e-2), (
        "mismatch vs reference", float(jnp.max(jnp.abs(scores - ref))))

    print("KERNEL_OK")
</pallas_src>

<mosaic_0001>
module attributes {stable_mosaic.version = 11 : i64} {
  func.func @_critic_kernel(%arg0: i32, %arg1: i32, %arg2: memref<128x128xbf16, #tpu.memory_space<vmem>>, %arg3: memref<128x128xbf16, #tpu.memory_space<vmem>>, %arg4: memref<432x128xbf16, #tpu.memory_space<vmem>>, %arg5: memref<432x128xbf16, #tpu.memory_space<vmem>>, %arg6: memref<128x128xf32, #tpu.memory_space<vmem>>, %arg7: memref<128x128xbf16, #tpu.memory_space<vmem>>) attributes {dimension_semantics = [#tpu.dimension_semantics<parallel>, #tpu.dimension_semantics<arbitrary>], iteration_bounds = array<i64: 1, 1>, scalar_prefetch = 0 : i64, scratch_operands = 1 : i64, tpu.core_type = #tpu.core_type<tc>, window_params = [{transform_indices = @transform_0, window_bounds = array<i64: 128, 128>}, {transform_indices = @transform_1, window_bounds = array<i64: 128, 128>}, {pipeline_mode = #tpu.pipeline_mode<synchronous>, transform_indices = @transform_2, window_bounds = array<i64: 432, 128>}, {pipeline_mode = #tpu.pipeline_mode<synchronous>, transform_indices = @transform_3, window_bounds = array<i64: 432, 128>}, {transform_indices = @transform_4, window_bounds = array<i64: 128, 128>}]} {
    %c0_i32 = arith.constant 0 : i32
    %0 = arith.cmpi eq, %arg1, %c0_i32 : i32
    %1 = arith.extui %0 : i1 to i32
    %c0_i32_0 = arith.constant 0 : i32
    %2 = arith.cmpi ne, %1, %c0_i32_0 : i32
    scf.if %2 {
      %c0_18 = arith.constant 0 : index
      %c0_19 = arith.constant 0 : index
      %32 = vector.load %arg2[%c0_18, %c0_19] : memref<128x128xbf16, #tpu.memory_space<vmem>>, vector<128x128xbf16>
      %c0_20 = arith.constant 0 : index
      %c0_21 = arith.constant 0 : index
      %33 = vector.load %arg4[%c0_20, %c0_21] : memref<432x128xbf16, #tpu.memory_space<vmem>>, vector<128x128xbf16>
      %c128_22 = arith.constant 128 : index
      %c0_23 = arith.constant 0 : index
      %34 = vector.load %arg4[%c128_22, %c0_23] : memref<432x128xbf16, #tpu.memory_space<vmem>>, vector<1x128xbf16>
      %cst_24 = arith.constant dense<0.000000e+00> : vector<128x128xf32>
      %35 = tpu.matmul %32, %33, %cst_24 {dimension_numbers = #tpu.dot_dimension_numbers<[1], [0], [0], [1], [0, 0, 1, 1], [], []>} : vector<128x128xbf16>, vector<128x128xbf16>, vector<128x128xf32> -> vector<128x128xf32>
      %36 = arith.extf %34 : vector<1x128xbf16> to vector<1x128xf32>
      %37 = vector.broadcast %36 : vector<1x128xf32> to vector<128x128xf32>
      %38 = arith.addf %35, %37 : vector<128x128xf32>
      %cst_25 = arith.constant 0.000000e+00 : f32
      %39 = vector.broadcast %cst_25 : f32 to vector<128x128xf32>
      %40 = arith.maximumf %38, %39 : vector<128x128xf32>
      %41 = arith.truncf %40 : vector<128x128xf32> to vector<128x128xbf16>
      %c144_26 = arith.constant 144 : index
      %c0_27 = arith.constant 0 : index
      %42 = vector.load %arg4[%c144_26, %c0_27] : memref<432x128xbf16, #tpu.memory_space<vmem>>, vector<128x128xbf16>
      %c272_28 = arith.constant 272 : index
      %c0_29 = arith.constant 0 : index
      %43 = vector.load %arg4[%c272_28, %c0_29] : memref<432x128xbf16, #tpu.memory_space<vmem>>, vector<1x128xbf16>
      %cst_30 = arith.constant dense<0.000000e+00> : vector<128x128xf32>
      %44 = tpu.matmul %41, %42, %cst_30 {dimension_numbers = #tpu.dot_dimension_numbers<[1], [0], [0], [1], [0, 0, 1, 1], [], []>} : vector<128x128xbf16>, vector<128x128xbf16>, vector<128x128xf32> -> vector<128x128xf32>
      %45 = arith.extf %43 : vector<1x128xbf16> to vector<1x128xf32>
      %46 = vector.broadcast %45 : vector<1x128xf32> to vector<128x128xf32>
      %47 = arith.addf %44, %46 : vector<128x128xf32>
      %cst_31 = arith.constant 0.000000e+00 : f32
      %48 = vector.broadcast %cst_31 : f32 to vector<128x128xf32>
      %49 = arith.maximumf %47, %48 : vector<128x128xf32>
      %50 = arith.truncf %49 : vector<128x128xf32> to vector<128x128xbf16>
      %c288_32 = arith.constant 288 : index
      %c0_33 = arith.constant 0 : index
      %51 = vector.load %arg4[%c288_32, %c0_33] : memref<432x128xbf16, #tpu.memory_space<vmem>>, vector<128x128xbf16>
      %c416_34 = arith.constant 416 : index
      %c0_35 = arith.constant 0 : index
      %52 = vector.load %arg4[%c416_34, %c0_35] : memref<432x128xbf16, #tpu.memory_space<vmem>>, vector<1x128xbf16>
      %cst_36 = arith.constant dense<0.000000e+00> : vector<128x128xf32>
      %53 = tpu.matmul %50, %51, %cst_36 {dimension_numbers = #tpu.dot_dimension_numbers<[1], [0], [0], [1], [0, 0, 1, 1], [], []>} : vector<128x128xbf16>, vector<128x128xbf16>, vector<128x128xf32> -> vector<128x128xf32>
      %54 = arith.extf %52 : vector<1x128xbf16> to vector<1x128xf32>
      %55 = vector.broadcast %54 : vector<1x128xf32> to vector<128x128xf32>
      %56 = arith.addf %53, %55 : vector<128x128xf32>
      %57 = arith.truncf %56 : vector<128x128xf32> to vector<128x128xbf16>
      %c0_37 = arith.constant 0 : index
      %c0_38 = arith.constant 0 : index
      %58 = vector.load %arg7[%c0_37, %c0_38] : memref<128x128xbf16, #tpu.memory_space<vmem>>, vector<128x128xbf16>
      tpu.vector_store %arg7[%c0_37, %c0_38], %57 {strides = array<i32>} : memref<128x128xbf16, #tpu.memory_space<vmem>>, vector<128x128xbf16>,
    } else {
    }
    %c0 = arith.constant 0 : index
    %c0_1 = arith.constant 0 : index
    %3 = vector.load %arg3[%c0, %c0_1] : memref<128x128xbf16, #tpu.memory_space<vmem>>, vector<128x128xbf16>
    %c0_2 = arith.constant 0 : index
    %c0_3 = arith.constant 0 : index
    %4 = vector.load %arg5[%c0_2, %c0_3] : memref<432x128xbf16, #tpu.memory_space<vmem>>, vector<128x128xbf16>
    %c128 = arith.constant 128 : index
    %c0_4 = arith.constant 0 : index
    %5 = vector.load %arg5[%c128, %c0_4] : memref<432x128xbf16, #tpu.memory_space<vmem>>, vector<1x128xbf16>
    %cst = arith.constant dense<0.000000e+00> : vector<128x128xf32>
    %6 = tpu.matmul %3, %4, %cst {dimension_numbers = #tpu.dot_dimension_numbers<[1], [0], [0], [1], [0, 0, 1, 1], [], []>} : vector<128x128xbf16>, vector<128x128xbf16>, vector<128x128xf32> -> vector<128x128xf32>
    %7 = arith.extf %5 : vector<1x128xbf16> to vector<1x128xf32>
    %8 = vector.broadcast %7 : vector<1x128xf32> to vector<128x128xf32>
    %9 = arith.addf %6, %8 : vector<128x128xf32>
    %cst_5 = arith.constant 0.000000e+00 : f32
    %10 = vector.broadcast %cst_5 : f32 to vector<128x128xf32>
    %11 = arith.maximumf %9, %10 : vector<128x128xf32>
    %12 = arith.truncf %11 : vector<128x128xf32> to vector<128x128xbf16>
    %c144 = arith.constant 144 : index
    %c0_6 = arith.constant 0 : index
    %13 = vector.load %arg5[%c144, %c0_6] : memref<432x128xbf16, #tpu.memory_space<vmem>>, vector<128x128xbf16>
    %c272 = arith.constant 272 : index
    %c0_7 = arith.constant 0 : index
    %14 = vector.load %arg5[%c272, %c0_7] : memref<432x128xbf16, #tpu.memory_space<vmem>>, vector<1x128xbf16>
    %cst_8 = arith.constant dense<0.000000e+00> : vector<128x128xf32>
    %15 = tpu.matmul %12, %13, %cst_8 {dimension_numbers = #tpu.dot_dimension_numbers<[1], [0], [0], [1], [0, 0, 1, 1], [], []>} : vector<128x128xbf16>, vector<128x128xbf16>, vector<128x128xf32> -> vector<128x128xf32>
    %16 = arith.extf %14 : vector<1x128xbf16> to vector<1x128xf32>
    %17 = vector.broadcast %16 : vector<1x128xf32> to vector<128x128xf32>
    %18 = arith.addf %15, %17 : vector<128x128xf32>
    %cst_9 = arith.constant 0.000000e+00 : f32
    %19 = vector.broadcast %cst_9 : f32 to vector<128x128xf32>
    %20 = arith.maximumf %18, %19 : vector<128x128xf32>
    %21 = arith.truncf %20 : vector<128x128xf32> to vector<128x128xbf16>
    %c288 = arith.constant 288 : index
    %c0_10 = arith.constant 0 : index
    %22 = vector.load %arg5[%c288, %c0_10] : memref<432x128xbf16, #tpu.memory_space<vmem>>, vector<128x128xbf16>
    %c416 = arith.constant 416 : index
    %c0_11 = arith.constant 0 : index
    %23 = vector.load %arg5[%c416, %c0_11] : memref<432x128xbf16, #tpu.memory_space<vmem>>, vector<1x128xbf16>
    %cst_12 = arith.constant dense<0.000000e+00> : vector<128x128xf32>
    %24 = tpu.matmul %21, %22, %cst_12 {dimension_numbers = #tpu.dot_dimension_numbers<[1], [0], [0], [1], [0, 0, 1, 1], [], []>} : vector<128x128xbf16>, vector<128x128xbf16>, vector<128x128xf32> -> vector<128x128xf32>
    %25 = arith.extf %23 : vector<1x128xbf16> to vector<1x128xf32>
    %26 = vector.broadcast %25 : vector<1x128xf32> to vector<128x128xf32>
    %27 = arith.addf %24, %26 : vector<128x128xf32>
    %28 = arith.truncf %27 : vector<128x128xf32> to vector<128x128xbf16>
    %c0_13 = arith.constant 0 : index
    %c0_14 = arith.constant 0 : index
    %29 = vector.load %arg7[%c0_13, %c0_14] : memref<128x128xbf16, #tpu.memory_space<vmem>>, vector<128x128xbf16>
    %cst_15 = arith.constant dense<0.000000e+00> : vector<128x128xf32>
    %30 = tpu.matmul %29, %28, %cst_15 {dimension_numbers = #tpu.dot_dimension_numbers<[1], [1], [0], [0], [0, 0, 1, 0], [], []>} : vector<128x128xbf16>, vector<128x128xbf16>, vector<128x128xf32> -> vector<128x128xf32>
    %c0_16 = arith.constant 0 : index
    %c0_17 = arith.constant 0 : index
    %31 = vector.load %arg6[%c0_16, %c0_17] : memref<128x128xf32, #tpu.memory_space<vmem>>, vector<128x128xf32>
    tpu.vector_store %arg6[%c0_16, %c0_17], %30 {strides = array<i32>} : memref<128x128xf32, #tpu.memory_space<vmem>>, vector<128x128xf32>,
    return
  }
  func.func @transform_0(%arg0: i32, %arg1: i32) -> (i32, i32) {
    %c0_i32 = arith.constant 0 : i32
    %c0_i32_0 = arith.constant 0 : i32
    return %arg0, %c0_i32 : i32, i32
  }
  func.func @transform_1(%arg0: i32, %arg1: i32) -> (i32, i32) {
    %c0_i32 = arith.constant 0 : i32
    %c0_i32_0 = arith.constant 0 : i32
    return %arg1, %c0_i32 : i32, i32
  }
  func.func @transform_2(%arg0: i32, %arg1: i32) -> (i32, i32) {
    %c0_i32 = arith.constant 0 : i32
    %c0_i32_0 = arith.constant 0 : i32
    %c0_i32_1 = arith.constant 0 : i32
    return %c0_i32, %c0_i32_0 : i32, i32
  }
  func.func @transform_3(%arg0: i32, %arg1: i32) -> (i32, i32) {
    %c0_i32 = arith.constant 0 : i32
    %c0_i32_0 = arith.constant 0 : i32
    %c0_i32_1 = arith.constant 0 : i32
    return %c0_i32, %c0_i32_0 : i32, i32
  }
  func.func @transform_4(%arg0: i32, %arg1: i32) -> (i32, i32) {
    %c0_i32 = arith.constant 0 : i32
    return %arg0, %arg1 : i32, i32
  }
}

</mosaic_0001>

<llo_original>
// kernel: separable_critic.1
$region0: #{separable_critic.1}
  #allocation0 [shape = 'u32[]', space=smem, size = 0x4, offset = 0x4, fixed_abs, tag = 'smem constant byte address 0x4 - core index']
  #allocation1 [shape = 'u32[144,128]{1,0:T(1,128)}', space=vmem, size = 0x12000, scoped, tag = 'internal scratch']
  #allocation2 [shape = 'bf16[128,128]{1,0:T(16,128)(2,1)}', space=vmem, size = 0x8000, scoped, tag = 'scratch operand']
  %s0 = inlined_call_operand.vmem [shape: bf16[128,128], index: 0, kind: input, shape index: {}]
  %s1 = inlined_call_operand.vmem [shape: bf16[128,128], index: 1, kind: input, shape index: {}]
  %s2 = inlined_call_operand.hbm [shape: bf16[432,128], index: 2, kind: input, shape index: {}]
  %s3 = inlined_call_operand.hbm [shape: bf16[432,128], index: 3, kind: input, shape index: {}]
  %s4 = inlined_call_operand.vmem [shape: f32[128,128], index: 4, kind: output, shape index: {}]
  %s5 = sld [smem:[#allocation0]]
  $region38: #{separable_critic.1} parent=0
    _
  %s7 = ssub.s32 1, %s5
  %s8 = scalar_select 0, %s7, %s5
  $region1: #{separable_critic.1} parent=0
    #allocation3 [shape = 'u8[110592]{0}', space=vmem, size = 0x1b000, scoped, tag = 'input window, operand 2, single buffered']
    #allocation4 [shape = 's32[1]{0}', space=sflag, size = 0x4, scoped, tag = 'scoped memory for separable_critic.1']
    #allocation5 [shape = 'u8[110592]{0}', space=vmem, size = 0x1b000, scoped, tag = 'input window, operand 3, single buffered']
    #allocation6 [shape = 's32[1]{0}', space=sflag, size = 0x4, scoped, tag = 'scoped memory for separable_critic.1']
    %9 = vsyncpa [#allocation4], 0
    %10 = vsyncpa [#allocation6], 0
    // Predicated region
    $region2: #{separable_critic.1} parent=1 // pred_check
      _
    $region3: #{separable_critic.1} parent=1 // pred_check_branch
      %12 = sbr.rel (0) target = $region5
    $region4: #{separable_critic.1} parent=1 // pred_region
      _
    $region5: #{separable_critic.1} parent=1 // pred_fallthru
      _
    // Predicated region
    $region6: #{separable_critic.1} parent=1 // pred_check
      _
    $region7: #{separable_critic.1} parent=1 // pred_check_branch
      %14 = sbr.rel (0) target = $region9
    $region8: #{separable_critic.1} parent=1 // pred_region
      _
    $region9: #{separable_critic.1} parent=1 // pred_fallthru
      _
    // Predicated region
    $region10: #{separable_critic.1} parent=1 // pred_check
      _
    $region11: #{separable_critic.1} parent=1 // pred_check_branch
      %16 = sbr.rel (0) target = $region13
    $region12: #{separable_critic.1} parent=1 // pred_region
      %s18 = ssub.s32 3456, 3456
      %19 = vsyncadd [#allocation4], %s18
      %s20 = sshll.u32 [#allocation3], 4
      %s21 = int_to_ptr.vmem [resolvable:$true] %s20
      %26 = dma.hbm_to_vmem [thread:$0]  %s2, 3456, %s21, [#allocation4], 64, 64, 4
    $region13: #{separable_critic.1} parent=1 // pred_fallthru
      _
    // Predicated region
    $region14: #{separable_critic.1} parent=1 // pred_check
      _
    $region15: #{separable_critic.1} parent=1 // pred_check_branch
      %28 = sbr.rel (0) target = $region17
    $region16: #{separable_critic.1} parent=1 // pred_region
      %s30 = ssub.s32 3456, 3456
      %31 = vsyncadd [#allocation6], %s30
      %s32 = sshll.u32 [#allocation5], 4
      %s33 = int_to_ptr.vmem [resolvable:$true] %s32
      %38 = dma.hbm_to_vmem [thread:$0]  %s3, 3456, %s33, [#allocation6], 64, 64, 4
    $region17: #{separable_critic.1} parent=1 // pred_fallthru
      _
    // Predicated region
    $region18: #{separable_critic.1} parent=1 // pred_check
      _
    $region19: #{separable_critic.1} parent=1 // pred_check_branch
      %40 = sbr.rel (0) target = $region21
    $region20: #{separable_critic.1} parent=1 // pred_region
      %41 = dma.done [#allocation4], 3456
    $region21: #{separable_critic.1} parent=1 // pred_fallthru
      _
    // Predicated region
    $region22: #{separable_critic.1} parent=1 // pred_check
      _
    $region23: #{separable_critic.1} parent=1 // pred_check_branch
      %43 = sbr.rel (0) target = $region25
    $region24: #{separable_critic.1} parent=1 // pred_region
      %44 = dma.done [#allocation6], 3456
    $region25: #{separable_critic.1} parent=1 // pred_fallthru
      _
    %p46 = scmp.eq.s32.totalorder 0, 0
    // Predicated region
    $region26: #{separable_critic.1} parent=1 // pred_check
      %p47 = pneg %p46
    $region27: #{separable_critic.1} parent=1 // pred_check_branch
      %49 = sbr.rel (%p47) target = $region29
    $region28: #{separable_critic.1} parent=1 // pred_region
      %v50 = vld [vmem:[%s0] sm:$0xf]
      %v51 = vld [vmem:[%s0 + $0x4] sm:$0xf]
      %v52 = vld [vmem:[%s0 + $0x8] sm:$0xf]
      %v53 = vld [vmem:[%s0 + $0xc] sm:$0xf]
      %v54 = vld [vmem:[%s0 + $0x10] sm:$0xf]
      %v55 = vld [vmem:[%s0 + $0x14] sm:$0xf]
      %v56 = vld [vmem:[%s0 + $0x18] sm:$0xf]
      %v57 = vld [vmem:[%s0 + $0x1c] sm:$0xf]
      %v58 = vld [vmem:[%s0 + $0x20] sm:$0xf]
      %v59 = vld [vmem:[%s0 + $0x24] sm:$0xf]
      %v60 = vld [vmem:[%s0 + $0x28] sm:$0xf]
      %v61 = vld [vmem:[%s0 + $0x2c] sm:$0xf]
      %v62 = vld [vmem:[%s0 + $0x30] sm:$0xf]
      %v63 = vld [vmem:[%s0 + $0x34] sm:$0xf]
      %v64 = vld [vmem:[%s0 + $0x38] sm:$0xf]
      %v65 = vld [vmem:[%s0 + $0x3c] sm:$0xf]
      %v66 = vld [vmem:[#allocation3] sm:$0xf]
      %v67 = vld [vmem:[#allocation3 + $0x4] sm:$0xf]
      %v68 = vld [vmem:[#allocation3 + $0x8] sm:$0xf]
      %v69 = vld [vmem:[#allocation3 + $0xc] sm:$0xf]
      %v70 = vld [vmem:[#allocation3 + $0x10] sm:$0xf]
      %v71 = vld [vmem:[#allocation3 + $0x14] sm:$0xf]
      %v72 = vld [vmem:[#allocation3 + $0x18] sm:$0xf]
      %v73 = vld [vmem:[#allocation3 + $0x1c] sm:$0xf]
      %v74 = vld [vmem:[#allocation3 + $0x20] sm:$0xf]
      %v75 = vld [vmem:[#allocation3 + $0x24] sm:$0xf]
      %v76 = vld [vmem:[#allocation3 + $0x28] sm:$0xf]
      %v77 = vld [vmem:[#allocation3 + $0x2c] sm:$0xf]
      %v78 = vld [vmem:[#allocation3 + $0x30] sm:$0xf]
      %v79 = vld [vmem:[#allocation3 + $0x34] sm:$0xf]
      %v80 = vld [vmem:[#allocation3 + $0x38] sm:$0xf]
      %v81 = vld [vmem:[#allocation3 + $0x3c] sm:$0xf]
      %v82 = vld [vmem:[#allocation3 + $0x40] sm:$0x1]
      %v83 = vunpack.c.l.bf16 %v82
      %v84 = vlaneseq
      %v85 = vshrl.u32 %v84, 7
      %v86 = vsub.s32 0, %v85
      %v87 = vrot.slane %v83, %v86
      %v104 = vunpack.c.l.b16 %v50
      %v105 = vunpack.c.l.b16 %v51
      %v106 = vunpack.c.l.b16 %v52
      %v107 = vunpack.c.l.b16 %v53
      %v108 = vunpack.c.l.b16 %v54
      %v109 = vunpack.c.l.b16 %v55
      %v110 = vunpack.c.l.b16 %v56
      %v111 = vunpack.c.l.b16 %v57
      %v112 = vunpack.c.l.b16 %v58
      %v113 = vunpack.c.l.b16 %v59
      %v114 = vunpack.c.l.b16 %v60
      %v115 = vunpack.c.l.b16 %v61
      %v116 = vunpack.c.l.b16 %v62
      %v117 = vunpack.c.l.b16 %v63
      %v118 = vunpack.c.l.b16 %v64
      %v119 = vunpack.c.l.b16 %v65
      %v120 = vpack.c.b16 %v105, %v104
      %v121 = vpack.c.b16 %v107, %v106
      %v122 = vpack.c.b16 %v109, %v108
      %v123 = vpack.c.b16 %v111, %v110
      %v124 = vpack.c.b16 %v113, %v112
      %v125 = vpack.c.b16 %v115, %v114
      %v126 = vpack.c.b16 %v117, %v116
      %v127 = vpack.c.b16 %v119, %v118
      %v152 = vunpack.c.l.b16 %v66
      %v153 = vunpack.c.l.b16 %v67
      %v154 = vunpack.c.l.b16 %v68
      %v155 = vunpack.c.l.b16 %v69
      %v156 = vunpack.c.l.b16 %v70
      %v157 = vunpack.c.l.b16 %v71
      %v158 = vunpack.c.l.b16 %v72
      %v159 = vunpack.c.l.b16 %v73
      %v160 = vunpack.c.l.b16 %v74
      %v161 = vunpack.c.l.b16 %v75
      %v162 = vunpack.c.l.b16 %v76
      %v163 = vunpack.c.l.b16 %v77
      %v164 = vunpack.c.l.b16 %v78
      %v165 = vunpack.c.l.b16 %v79
      %v166 = vunpack.c.l.b16 %v80
      %v167 = vunpack.c.l.b16 %v81
      %v168 = vpack.c.b16 %v153, %v152
      %v169 = vpack.c.b16 %v155, %v154
      %v170 = vpack.c.b16 %v157, %v156
      %v171 = vpack.c.b16 %v159, %v158
      %v172 = vpack.c.b16 %v161, %v160
      %v173 = vpack.c.b16 %v163, %v162
      %v174 = vpack.c.b16 %v165, %v164
      %v175 = vpack.c.b16 %v167, %v166
      %184 = vmatprep.subr.bf16.mxu0 0
      %185 = vmatpush1.bf16.msra.mxu0 %v168
      %186 = vmatprep.subr.bf16.mxu0 0
      %187 = vmatpush1.bf16.msra.mxu0 %v169
      %188 = vmatprep.subr.bf16.mxu0 0
      %189 = vmatpush1.bf16.msra.mxu0 %v170
      %190 = vmatprep.subr.bf16.mxu0 0
      %191 = vmatpush1.bf16.msra.mxu0 %v171
      %192 = vmatprep.subr.bf16.mxu0 0
      %193 = vmatpush1.bf16.msra.mxu0 %v172
      %194 = vmatprep.subr.bf16.mxu0 0
      %195 = vmatpush1.bf16.msra.mxu0 %v173
      %196 = vmatprep.subr.bf16.mxu0 0
      %197 = vmatpush1.bf16.msra.mxu0 %v174
      %198 = vmatprep.subr.bf16.mxu0 0
      %199 = vmatpush1.bf16.msra.mxu0 %v175
      %200 = vmatprep.subr.bf16.mxu0 0
      %201 = vmatpush1.bf16.msra.mxu0 0
      %202 = vmatprep.subr.bf16.mxu0 0
      %203 = vmatpush1.bf16.msra.mxu0 0
      %204 = vmatprep.subr.bf16.mxu0 0
      %205 = vmatpush1.bf16.msra.mxu0 0
      %206 = vmatprep.subr.bf16.mxu0 0
      %207 = vmatpush1.bf16.msra.mxu0 0
      %208 = vmatprep.subr.bf16.mxu0 0
      %209 = vmatpush1.bf16.msra.mxu0 0
      %210 = vmatprep.subr.bf16.mxu0 0
      %211 = vmatpush1.bf16.msra.mxu0 0
      %212 = vmatprep.subr.bf16.mxu0 0
      %213 = vmatpush1.bf16.msra.mxu0 0
      %214 = vmatprep.subr.bf16.mxu0 0
      %215 = vmatpush1.bf16.msra.mxu0 0
      %216 = vmatprep.mubr.bf16.mxu0 0
      %217 = vmatmul.mubr.bf16.gmra.mrb[0].mxu0 %v120
      %v218 = vpop.f32.mrb[0].mxu0
      %v219 = vadd.f32 %v87, %v218
      %v220 = vpop.f32.mrb[0].mxu0
      %v221 = vpop.f32.mrb[0].mxu0
      %v222 = vadd.f32 %v87, %v221
      %v223 = vpop.f32.mrb[0].mxu0
      %224 = vmatprep.mubr.bf16.mxu0 0
      %225 = vmatmul.mubr.bf16.gmra.mrb[0].mxu0 %v121
      %v226 = vpop.f32.mrb[0].mxu0
      %v227 = vadd.f32 %v87, %v226
      %v228 = vpop.f32.mrb[0].mxu0
      %v229 = vpop.f32.mrb[0].mxu0
      %v230 = vadd.f32 %v87, %v229
      %v231 = vpop.f32.mrb[0].mxu0
      %232 = vmatprep.mubr.bf16.mxu0 0
      %233 = vmatmul.mubr.bf16.gmra.mrb[0].mxu0 %v122
      %v234 = vpop.f32.mrb[0].mxu0
      %v235 = vadd.f32 %v87, %v234
      %v236 = vpop.f32.mrb[0].mxu0
      %v237 = vpop.f32.mrb[0].mxu0
      %v238 = vadd.f32 %v87, %v237
      %v239 = vpop.f32.mrb[0].mxu0
      %240 = vmatprep.mubr.bf16.mxu0 0
      %241 = vmatmul.mubr.bf16.gmra.mrb[0].mxu0 %v123
      %v242 = vpop.f32.mrb[0].mxu0
      %v243 = vadd.f32 %v87, %v242
      %v244 = vpop.f32.mrb[0].mxu0
      %v245 = vpop.f32.mrb[0].mxu0
      %v246 = vadd.f32 %v87, %v245
      %v247 = vpop.f32.mrb[0].mxu0
      %248 = vmatprep.mubr.bf16.mxu0 0
      %249 = vmatmul.mubr.bf16.gmra.mrb[0].mxu0 %v124
      %v250 = vpop.f32.mrb[0].mxu0
      %v251 = vadd.f32 %v87, %v250
      %v252 = vpop.f32.mrb[0].mxu0
      %v253 = vpop.f32.mrb[0].mxu0
      %v254 = vadd.f32 %v87, %v253
      %v255 = vpop.f32.mrb[0].mxu0
      %256 = vmatprep.mubr.bf16.mxu0 0
      %257 = vmatmul.mubr.bf16.gmra.mrb[0].mxu0 %v125
      %v258 = vpop.f32.mrb[0].mxu0
      %v259 = vadd.f32 %v87, %v258
      %v260 = vpop.f32.mrb[0].mxu0
      %v261 = vpop.f32.mrb[0].mxu0
      %v262 = vadd.f32 %v87, %v261
      %v263 = vpop.f32.mrb[0].mxu0
      %264 = vmatprep.mubr.bf16.mxu0 0
      %265 = vmatmul.mubr.bf16.gmra.mrb[0].mxu0 %v126
      %v266 = vpop.f32.mrb[0].mxu0
      %v267 = vadd.f32 %v87, %v266
      %v268 = vpop.f32.mrb[0].mxu0
      %v269 = vpop.f32.mrb[0].mxu0
      %v270 = vadd.f32 %v87, %v269
      %v271 = vpop.f32.mrb[0].mxu0
      %272 = vmatprep.mubr.bf16.mxu0 0
      %273 = vmatmul.mubr.bf16.gmra.mrb[0].mxu0 %v127
      %v274 = vpop.f32.mrb[0].mxu0
      %v275 = vadd.f32 %v87, %v274
      %v276 = vpop.f32.mrb[0].mxu0
      %v277 = vpop.f32.mrb[0].mxu0
      %v278 = vadd.f32 %v87, %v277
      %v279 = vpop.f32.mrb[0].mxu0
      %280 = vdwg.mxu0
      %v281 = vmax.f32 %v219, 0.0
      %v282 = vmax.f32 %v222, 0.0
      %v283 = vmax.f32 %v227, 0.0
      %v284 = vmax.f32 %v230, 0.0
      %v285 = vmax.f32 %v235, 0.0
      %v286 = vmax.f32 %v238, 0.0
      %v287 = vmax.f32 %v243, 0.0
      %v288 = vmax.f32 %v246, 0.0
      %v289 = vmax.f32 %v251, 0.0
      %v290 = vmax.f32 %v254, 0.0
      %v291 = vmax.f32 %v259, 0.0
      %v292 = vmax.f32 %v262, 0.0
      %v293 = vmax.f32 %v267, 0.0
      %v294 = vmax.f32 %v270, 0.0
      %v295 = vmax.f32 %v275, 0.0
      %v296 = vmax.f32 %v278, 0.0
      %v297 = vpack.c.bf16 %v282, %v281
      %v298 = vpack.c.bf16 %v284, %v283
      %v299 = vpack.c.bf16 %v286, %v285
      %v300 = vpack.c.bf16 %v288, %v287
      %v301 = vpack.c.bf16 %v290, %v289
      %v302 = vpack.c.bf16 %v292, %v291
      %v303 = vpack.c.bf16 %v294, %v293
      %v304 = vpack.c.bf16 %v296, %v295
      %v305 = vld [vmem:[#allocation3 + $0x48] sm:$0xf]
      %v306 = vld [vmem:[#allocation3 + $0x4c] sm:$0xf]
      %v307 = vld [vmem:[#allocation3 + $0x50] sm:$0xf]
      %v308 = vld [vmem:[#allocation3 + $0x54] sm:$0xf]
      %v309 = vld [vmem:[#allocation3 + $0x58] sm:$0xf]
      %v310 = vld [vmem:[#allocation3 + $0x5c] sm:$0xf]
      %v311 = vld [vmem:[#allocation3 + $0x60] sm:$0xf]
      %v312 = vld [vmem:[#allocation3 + $0x64] sm:$0xf]
      %v313 = vld [vmem:[#allocation3 + $0x68] sm:$0xf]
      %v314 = vld [vmem:[#allocation3 + $0x6c] sm:$0xf]
      %v315 = vld [vmem:[#allocation3 + $0x70] sm:$0xf]
      %v316 = vld [vmem:[#allocation3 + $0x74] sm:$0xf]
      %v317 = vld [vmem:[#allocation3 + $0x78] sm:$0xf]
      %v318 = vld [vmem:[#allocation3 + $0x7c] sm:$0xf]
      %v319 = vld [vmem:[#allocation3 + $0x80] sm:$0xf]
      %v320 = vld [vmem:[#allocation3 + $0x84] sm:$0xf]
      %v321 = vld [vmem:[#allocation3 + $0x88] sm:$0x1]
      %v322 = vunpack.c.l.bf16 %v321
      %v323 = vlaneseq
      %v324 = vshrl.u32 %v323, 7
      %v325 = vsub.s32 0, %v324
      %v326 = vrot.slane %v322, %v325
      %v343 = vunpack.c.l.b16 %v305
      %v344 = vunpack.c.l.b16 %v306
      %v345 = vunpack.c.l.b16 %v307
      %v346 = vunpack.c.l.b16 %v308
      %v347 = vunpack.c.l.b16 %v309
      %v348 = vunpack.c.l.b16 %v310
      %v349 = vunpack.c.l.b16 %v311
      %v350 = vunpack.c.l.b16 %v312
      %v351 = vunpack.c.l.b16 %v313
      %v352 = vunpack.c.l.b16 %v314
      %v353 = vunpack.c.l.b16 %v315
      %v354 = vunpack.c.l.b16 %v316
      %v355 = vunpack.c.l.b16 %v317
      %v356 = vunpack.c.l.b16 %v318
      %v357 = vunpack.c.l.b16 %v319
      %v358 = vunpack.c.l.b16 %v320
      %v359 = vpack.c.b16 %v344, %v343
      %v360 = vpack.c.b16 %v346, %v345
      %v361 = vpack.c.b16 %v348, %v347
      %v362 = vpack.c.b16 %v350, %v349
      %v363 = vpack.c.b16 %v352, %v351
      %v364 = vpack.c.b16 %v354, %v353
      %v365 = vpack.c.b16 %v356, %v355
      %v366 = vpack.c.b16 %v358, %v357
      %375 = vmatprep.subr.bf16.mxu0 0
      %376 = vmatpush1.bf16.msra.mxu0 %v359
      %377 = vmatprep.subr.bf16.mxu0 0
      %378 = vmatpush1.bf16.msra.mxu0 %v360
      %379 = vmatprep.subr.bf16.mxu0 0
      %380 = vmatpush1.bf16.msra.mxu0 %v361
      %381 = vmatprep.subr.bf16.mxu0 0
      %382 = vmatpush1.bf16.msra.mxu0 %v362
      %383 = vmatprep.subr.bf16.mxu0 0
      %384 = vmatpush1.bf16.msra.mxu0 %v363
      %385 = vmatprep.subr.bf16.mxu0 0
      %386 = vmatpush1.bf16.msra.mxu0 %v364
      %387 = vmatprep.subr.bf16.mxu0 0
      %388 = vmatpush1.bf16.msra.mxu0 %v365
      %389 = vmatprep.subr.bf16.mxu0 0
      %390 = vmatpush1.bf16.msra.mxu0 %v366
      %391 = vmatprep.subr.bf16.mxu0 0
      %392 = vmatpush1.bf16.msra.mxu0 0
      %393 = vmatprep.subr.bf16.mxu0 0
      %394 = vmatpush1.bf16.msra.mxu0 0
      %395 = vmatprep.subr.bf16.mxu0 0
      %396 = vmatpush1.bf16.msra.mxu0 0
      %397 = vmatprep.subr.bf16.mxu0 0
      %398 = vmatpush1.bf16.msra.mxu0 0
      %399 = vmatprep.subr.bf16.mxu0 0
      %400 = vmatpush1.bf16.msra.mxu0 0
      %401 = vmatprep.subr.bf16.mxu0 0
      %402 = vmatpush1.bf16.msra.mxu0 0
      %403 = vmatprep.subr.bf16.mxu0 0
      %404 = vmatpush1.bf16.msra.mxu0 0
      %405 = vmatprep.subr.bf16.mxu0 0
      %406 = vmatpush1.bf16.msra.mxu0 0
      %407 = vmatprep.mubr.bf16.mxu0 0
      %408 = vmatmul.mubr.bf16.gmra.mrb[0].mxu0 %v297
      %v409 = vpop.f32.mrb[0].mxu0
      %v410 = vadd.f32 %v326, %v409
      %v411 = vpop.f32.mrb[0].mxu0
      %v412 = vpop.f32.mrb[0].mxu0
      %v413 = vadd.f32 %v326, %v412
      %v414 = vpop.f32.mrb[0].mxu0
      %415 = vmatprep.mubr.bf16.mxu0 0
      %416 = vmatmul.mubr.bf16.gmra.mrb[0].mxu0 %v298
      %v417 = vpop.f32.mrb[0].mxu0
      %v418 = vadd.f32 %v326, %v417
      %v419 = vpop.f32.mrb[0].mxu0
      %v420 = vpop.f32.mrb[0].mxu0
      %v421 = vadd.f32 %v326, %v420
      %v422 = vpop.f32.mrb[0].mxu0
      %423 = vmatprep.mubr.bf16.mxu0 0
      %424 = vmatmul.mubr.bf16.gmra.mrb[0].mxu0 %v299
      %v425 = vpop.f32.mrb[0].mxu0
      %v426 = vadd.f32 %v326, %v425
      %v427 = vpop.f32.mrb[0].mxu0
      %v428 = vpop.f32.mrb[0].mxu0
      %v429 = vadd.f32 %v326, %v428
      %v430 = vpop.f32.mrb[0].mxu0
      %431 = vmatprep.mubr.bf16.mxu0 0
      %432 = vmatmul.mubr.bf16.gmra.mrb[0].mxu0 %v300
      %v433 = vpop.f32.mrb[0].mxu0
      %v434 = vadd.f32 %v326, %v433
      %v435 = vpop.f32.mrb[0].mxu0
      %v436 = vpop.f32.mrb[0].mxu0
      %v437 = vadd.f32 %v326, %v436
      %v438 = vpop.f32.mrb[0].mxu0
      %439 = vmatprep.mubr.bf16.mxu0 0
      %440 = vmatmul.mubr.bf16.gmra.mrb[0].mxu0 %v301
      %v441 = vpop.f32.mrb[0].mxu0
      %v442 = vadd.f32 %v326, %v441
      %v443 = vpop.f32.mrb[0].mxu0
      %v444 = vpop.f32.mrb[0].mxu0
      %v445 = vadd.f32 %v326, %v444
      %v446 = vpop.f32.mrb[0].mxu0
      %447 = vmatprep.mubr.bf16.mxu0 0
      %448 = vmatmul.mubr.bf16.gmra.mrb[0].mxu0 %v302
      %v449 = vpop.f32.mrb[0].mxu0
      %v450 = vadd.f32 %v326, %v449
      %v451 = vpop.f32.mrb[0].mxu0
      %v452 = vpop.f32.mrb[0].mxu0
      %v453 = vadd.f32 %v326, %v452
      %v454 = vpop.f32.mrb[0].mxu0
      %455 = vmatprep.mubr.bf16.mxu0 0
      %456 = vmatmul.mubr.bf16.gmra.mrb[0].mxu0 %v303
      %v457 = vpop.f32.mrb[0].mxu0
      %v458 = vadd.f32 %v326, %v457
      %v459 = vpop.f32.mrb[0].mxu0
      %v460 = vpop.f32.mrb[0].mxu0
      %v461 = vadd.f32 %v326, %v460
      %v462 = vpop.f32.mrb[0].mxu0
      %463 = vmatprep.mubr.bf16.mxu0 0
      %464 = vmatmul.mubr.bf16.gmra.mrb[0].mxu0 %v304
      %v465 = vpop.f32.mrb[0].mxu0
      %v466 = vadd.f32 %v326, %v465
      %v467 = vpop.f32.mrb[0].mxu0
      %v468 = vpop.f32.mrb[0].mxu0
      %v469 = vadd.f32 %v326, %v468
      %v470 = vpop.f32.mrb[0].mxu0
      %471 = vdwg.mxu0
      %v472 = vmax.f32 %v410, 0.0
      %v473 = vmax.f32 %v413, 0.0
      %v474 = vmax.f32 %v418, 0.0
      %v475 = vmax.f32 %v421, 0.0
      %v476 = vmax.f32 %v426, 0.0
      %v477 = vmax.f32 %v429, 0.0
      %v478 = vmax.f32 %v434, 0.0
      %v479 = vmax.f32 %v437, 0.0
      %v480 = vmax.f32 %v442, 0.0
      %v481 = vmax.f32 %v445, 0.0
      %v482 = vmax.f32 %v450, 0.0
      %v483 = vmax.f32 %v453, 0.0
      %v484 = vmax.f32 %v458, 0.0
      %v485 = vmax.f32 %v461, 0.0
      %v486 = vmax.f32 %v466, 0.0
      %v487 = vmax.f32 %v469, 0.0
      %v488 = vpack.c.bf16 %v473, %v472
      %v489 = vpack.c.bf16 %v475, %v474
      %v490 = vpack.c.bf16 %v477, %v476
      %v491 = vpack.c.bf16 %v479, %v478
      %v492 = vpack.c.bf16 %v481, %v480
      %v493 = vpack.c.bf16 %v483, %v482
      %v494 = vpack.c.bf16 %v485, %v484
      %v495 = vpack.c.bf16 %v487, %v486
      %v496 = vld [vmem:[#allocation3 + $0x90] sm:$0xf]
      %v497 = vld [vmem:[#allocation3 + $0x94] sm:$0xf]
      %v498 = vld [vmem:[#allocation3 + $0x98] sm:$0xf]
      %v499 = vld [vmem:[#allocation3 + $0x9c] sm:$0xf]
      %v500 = vld [vmem:[#allocation3 + $0xa0] sm:$0xf]
      %v501 = vld [vmem:[#allocation3 + $0xa4] sm:$0xf]
      %v502 = vld [vmem:[#allocation3 + $0xa8] sm:$0xf]
      %v503 = vld [vmem:[#allocation3 + $0xac] sm:$0xf]
      %v504 = vld [vmem:[#allocation3 + $0xb0] sm:$0xf]
      %v505 = vld [vmem:[#allocation3 + $0xb4] sm:$0xf]
      %v506 = vld [vmem:[#allocation3 + $0xb8] sm:$0xf]
      %v507 = vld [vmem:[#allocation3 + $0xbc] sm:$0xf]
      %v508 = vld [vmem:[#allocation3 + $0xc0] sm:$0xf]
      %v509 = vld [vmem:[#allocation3 + $0xc4] sm:$0xf]
      %v510 = vld [vmem:[#allocation3 + $0xc8] sm:$0xf]
      %v511 = vld [vmem:[#allocation3 + $0xcc] sm:$0xf]
      %v512 = vld [vmem:[#allocation3 + $0xd0] sm:$0x1]
      %v513 = vunpack.c.l.bf16 %v512
      %v514 = vlaneseq
      %v515 = vshrl.u32 %v514, 7
      %v516 = vsub.s32 0, %v515
      %v517 = vrot.slane %v513, %v516
      %v534 = vunpack.c.l.b16 %v496
      %v535 = vunpack.c.l.b16 %v497
      %v536 = vunpack.c.l.b16 %v498
      %v537 = vunpack.c.l.b16 %v499
      %v538 = vunpack.c.l.b16 %v500
      %v539 = vunpack.c.l.b16 %v501
      %v540 = vunpack.c.l.b16 %v502
      %v541 = vunpack.c.l.b16 %v503
      %v542 = vunpack.c.l.b16 %v504
      %v543 = vunpack.c.l.b16 %v505
      %v544 = vunpack.c.l.b16 %v506
      %v545 = vunpack.c.l.b16 %v507
      %v546 = vunpack.c.l.b16 %v508
      %v547 = vunpack.c.l.b16 %v509
      %v548 = vunpack.c.l.b16 %v510
      %v549 = vunpack.c.l.b16 %v511
      %v550 = vpack.c.b16 %v535, %v534
      %v551 = vpack.c.b16 %v537, %v536
      %v552 = vpack.c.b16 %v539, %v538
      %v553 = vpack.c.b16 %v541, %v540
      %v554 = vpack.c.b16 %v543, %v542
      %v555 = vpack.c.b16 %v545, %v544
      %v556 = vpack.c.b16 %v547, %v546
      %v557 = vpack.c.b16 %v549, %v548
      %566 = vmatprep.subr.bf16.mxu0 0
      %567 = vmatpush1.bf16.msra.mxu0 %v550
      %568 = vmatprep.subr.bf16.mxu0 0
      %569 = vmatpush1.bf16.msra.mxu0 %v551
      %570 = vmatprep.subr.bf16.mxu0 0
      %571 = vmatpush1.bf16.msra.mxu0 %v552
      %572 = vmatprep.subr.bf16.mxu0 0
      %573 = vmatpush1.bf16.msra.mxu0 %v553
      %574 = vmatprep.subr.bf16.mxu0 0
      %575 = vmatpush1.bf16.msra.mxu0 %v554
      %576 = vmatprep.subr.bf16.mxu0 0
      %577 = vmatpush1.bf16.msra.mxu0 %v555
      %578 = vmatprep.subr.bf16.mxu0 0
      %579 = vmatpush1.bf16.msra.mxu0 %v556
      %580 = vmatprep.subr.bf16.mxu0 0
      %581 = vmatpush1.bf16.msra.mxu0 %v557
      %582 = vmatprep.subr.bf16.mxu0 0
      %583 = vmatpush1.bf16.msra.mxu0 0
      %584 = vmatprep.subr.bf16.mxu0 0
      %585 = vmatpush1.bf16.msra.mxu0 0
      %586 = vmatprep.subr.bf16.mxu0 0
      %587 = vmatpush1.bf16.msra.mxu0 0
      %588 = vmatprep.subr.bf16.mxu0 0
      %589 = vmatpush1.bf16.msra.mxu0 0
      %590 = vmatprep.subr.bf16.mxu0 0
      %591 = vmatpush1.bf16.msra.mxu0 0
      %592 = vmatprep.subr.bf16.mxu0 0
      %593 = vmatpush1.bf16.msra.mxu0 0
      %594 = vmatprep.subr.bf16.mxu0 0
      %595 = vmatpush1.bf16.msra.mxu0 0
      %596 = vmatprep.subr.bf16.mxu0 0
      %597 = vmatpush1.bf16.msra.mxu0 0
      %598 = vmatprep.mubr.bf16.mxu0 0
      %599 = vmatmul.mubr.bf16.gmra.mrb[0].mxu0 %v488
      %v600 = vpop.f32.mrb[0].mxu0
      %v601 = vadd.f32 %v517, %v600
      %v602 = vpop.f32.mrb[0].mxu0
      %v603 = vpop.f32.mrb[0].mxu0
      %v604 = vadd.f32 %v517, %v603
      %v605 = vpop.f32.mrb[0].mxu0
      %606 = vmatprep.mubr.bf16.mxu0 0
      %607 = vmatmul.mubr.bf16.gmra.mrb[0].mxu0 %v489
      %v608 = vpop.f32.mrb[0].mxu0
      %v609 = vadd.f32 %v517, %v608
      %v610 = vpop.f32.mrb[0].mxu0
      %v611 = vpop.f32.mrb[0].mxu0
      %v612 = vadd.f32 %v517, %v611
      %v613 = vpop.f32.mrb[0].mxu0
      %614 = vmatprep.mubr.bf16.mxu0 0
      %615 = vmatmul.mubr.bf16.gmra.mrb[0].mxu0 %v490
      %v616 = vpop.f32.mrb[0].mxu0
      %v617 = vadd.f32 %v517, %v616
      %v618 = vpop.f32.mrb[0].mxu0
      %v619 = vpop.f32.mrb[0].mxu0
      %v620 = vadd.f32 %v517, %v619
      %v621 = vpop.f32.mrb[0].mxu0
      %622 = vmatprep.mubr.bf16.mxu0 0
      %623 = vmatmul.mubr.bf16.gmra.mrb[0].mxu0 %v491
      %v624 = vpop.f32.mrb[0].mxu0
      %v625 = vadd.f32 %v517, %v624
      %v626 = vpop.f32.mrb[0].mxu0
      %v627 = vpop.f32.mrb[0].mxu0
      %v628 = vadd.f32 %v517, %v627
      %v629 = vpop.f32.mrb[0].mxu0
      %630 = vmatprep.mubr.bf16.mxu0 0
      %631 = vmatmul.mubr.bf16.gmra.mrb[0].mxu0 %v492
      %v632 = vpop.f32.mrb[0].mxu0
      %v633 = vadd.f32 %v517, %v632
      %v634 = vpop.f32.mrb[0].mxu0
      %v635 = vpop.f32.mrb[0].mxu0
      %v636 = vadd.f32 %v517, %v635
      %v637 = vpop.f32.mrb[0].mxu0
      %638 = vmatprep.mubr.bf16.mxu0 0
      %639 = vmatmul.mubr.bf16.gmra.mrb[0].mxu0 %v493
      %v640 = vpop.f32.mrb[0].mxu0
      %v641 = vadd.f32 %v517, %v640
      %v642 = vpop.f32.mrb[0].mxu0
      %v643 = vpop.f32.mrb[0].mxu0
      %v644 = vadd.f32 %v517, %v643
      %v645 = vpop.f32.mrb[0].mxu0
      %646 = vmatprep.mubr.bf16.mxu0 0
      %647 = vmatmul.mubr.bf16.gmra.mrb[0].mxu0 %v494
      %v648 = vpop.f32.mrb[0].mxu0
      %v649 = vadd.f32 %v517, %v648
      %v650 = vpop.f32.mrb[0].mxu0
      %v651 = vpop.f32.mrb[0].mxu0
      %v652 = vadd.f32 %v517, %v651
      %v653 = vpop.f32.mrb[0].mxu0
      %654 = vmatprep.mubr.bf16.mxu0 0
      %655 = vmatmul.mubr.bf16.gmra.mrb[0].mxu0 %v495
      %v656 = vpop.f32.mrb[0].mxu0
      %v657 = vadd.f32 %v517, %v656
      %v658 = vpop.f32.mrb[0].mxu0
      %v659 = vpop.f32.mrb[0].mxu0
      %v660 = vadd.f32 %v517, %v659
      %v661 = vpop.f32.mrb[0].mxu0
      %662 = vdwg.mxu0
      %v663 = vpack.c.bf16 %v604, %v601
      %v664 = vpack.c.bf16 %v612, %v609
      %v665 = vpack.c.bf16 %v620, %v617
      %v666 = vpack.c.bf16 %v628, %v625
      %v667 = vpack.c.bf16 %v636, %v633
      %v668 = vpack.c.bf16 %v644, %v641
      %v669 = vpack.c.bf16 %v652, %v649
      %v670 = vpack.c.bf16 %v660, %v657
      %671 = vst [vmem:[#allocation2] sm:$0xff] %v663
      %672 = vst [vmem:[#allocation2 + $0x8] sm:$0xff] %v664
      %673 = vst [vmem:[#allocation2 + $0x10] sm:$0xff] %v665
      %674 = vst [vmem:[#allocation2 + $0x18] sm:$0xff] %v666
      %675 = vst [vmem:[#allocation2 + $0x20] sm:$0xff] %v667
      %676 = vst [vmem:[#allocation2 + $0x28] sm:$0xff] %v668
      %677 = vst [vmem:[#allocation2 + $0x30] sm:$0xff] %v669
      %678 = vst [vmem:[#allocation2 + $0x38] sm:$0xff] %v670
    $region29: #{separable_critic.1} parent=1 // pred_fallthru
      _
    %v679 = vld [vmem:[%s1] sm:$0xf]
    %v680 = vld [vmem:[%s1 + $0x4] sm:$0xf]
    %v681 = vld [vmem:[%s1 + $0x8] sm:$0xf]
    %v682 = vld [vmem:[%s1 + $0xc] sm:$0xf]
    %v683 = vld [vmem:[%s1 + $0x10] sm:$0xf]
    %v684 = vld [vmem:[%s1 + $0x14] sm:$0xf]
    %v685 = vld [vmem:[%s1 + $0x18] sm:$0xf]
    %v686 = vld [vmem:[%s1 + $0x1c] sm:$0xf]
    %v687 = vld [vmem:[%s1 + $0x20] sm:$0xf]
    %v688 = vld [vmem:[%s1 + $0x24] sm:$0xf]
    %v689 = vld [vmem:[%s1 + $0x28] sm:$0xf]
    %v690 = vld [vmem:[%s1 + $0x2c] sm:$0xf]
    %v691 = vld [vmem:[%s1 + $0x30] sm:$0xf]
    %v692 = vld [vmem:[%s1 + $0x34] sm:$0xf]
    %v693 = vld [vmem:[%s1 + $0x38] sm:$0xf]
    %v694 = vld [vmem:[%s1 + $0x3c] sm:$0xf]
    %v695 = vld [vmem:[#allocation5] sm:$0xf]
    %v696 = vld [vmem:[#allocation5 + $0x4] sm:$0xf]
    %v697 = vld [vmem:[#allocation5 + $0x8] sm:$0xf]
    %v698 = vld [vmem:[#allocation5 + $0xc] sm:$0xf]
    %v699 = vld [vmem:[#allocation5 + $0x10] sm:$0xf]
    %v700 = vld [vmem:[#allocation5 + $0x14] sm:$0xf]
    %v701 = vld [vmem:[#allocation5 + $0x18] sm:$0xf]
    %v702 = vld [vmem:[#allocation5 + $0x1c] sm:$0xf]
    %v703 = vld [vmem:[#allocation5 + $0x20] sm:$0xf]
    %v704 = vld [vmem:[#allocation5 + $0x24] sm:$0xf]
    %v705 = vld [vmem:[#allocation5 + $0x28] sm:$0xf]
    %v706 = vld [vmem:[#allocation5 + $0x2c] sm:$0xf]
    %v707 = vld [vmem:[#allocation5 + $0x30] sm:$0xf]
    %v708 = vld [vmem:[#allocation5 + $0x34] sm:$0xf]
    %v709 = vld [vmem:[#allocation5 + $0x38] sm:$0xf]
    %v710 = vld [vmem:[#allocation5 + $0x3c] sm:$0xf]
    %v711 = vld [vmem:[#allocation5 + $0x40] sm:$0x1]
    %v712 = vunpack.c.l.bf16 %v711
    %v713 = vlaneseq
    %v714 = vshrl.u32 %v713, 7
    %v715 = vsub.s32 0, %v714
    %v716 = vrot.slane %v712, %v715
    %v733 = vunpack.c.l.b16 %v679
    %v734 = vunpack.c.l.b16 %v680
    %v735 = vunpack.c.l.b16 %v681
    %v736 = vunpack.c.l.b16 %v682
    %v737 = vunpack.c.l.b16 %v683
    %v738 = vunpack.c.l.b16 %v684
    %v739 = vunpack.c.l.b16 %v685
    %v740 = vunpack.c.l.b16 %v686
    %v741 = vunpack.c.l.b16 %v687
    %v742 = vunpack.c.l.b16 %v688
    %v743 = vunpack.c.l.b16 %v689
    %v744 = vunpack.c.l.b16 %v690
    %v745 = vunpack.c.l.b16 %v691
    %v746 = vunpack.c.l.b16 %v692
    %v747 = vunpack.c.l.b16 %v693
    %v748 = vunpack.c.l.b16 %v694
    %v749 = vpack.c.b16 %v734, %v733
    %v750 = vpack.c.b16 %v736, %v735
    %v751 = vpack.c.b16 %v738, %v737
    %v752 = vpack.c.b16 %v740, %v739
    %v753 = vpack.c.b16 %v742, %v741
    %v754 = vpack.c.b16 %v744, %v743
    %v755 = vpack.c.b16 %v746, %v745
    %v756 = vpack.c.b16 %v748, %v747
    %v781 = vunpack.c.l.b16 %v695
    %v782 = vunpack.c.l.b16 %v696
    %v783 = vunpack.c.l.b16 %v697
    %v784 = vunpack.c.l.b16 %v698
    %v785 = vunpack.c.l.b16 %v699
    %v786 = vunpack.c.l.b16 %v700
    %v787 = vunpack.c.l.b16 %v701
    %v788 = vunpack.c.l.b16 %v702
    %v789 = vunpack.c.l.b16 %v703
    %v790 = vunpack.c.l.b16 %v704
    %v791 = vunpack.c.l.b16 %v705
    %v792 = vunpack.c.l.b16 %v706
    %v793 = vunpack.c.l.b16 %v707
    %v794 = vunpack.c.l.b16 %v708
    %v795 = vunpack.c.l.b16 %v709
    %v796 = vunpack.c.l.b16 %v710
    %v797 = vpack.c.b16 %v782, %v781
    %v798 = vpack.c.b16 %v784, %v783
    %v799 = vpack.c.b16 %v786, %v785
    %v800 = vpack.c.b16 %v788, %v787
    %v801 = vpack.c.b16 %v790, %v789
    %v802 = vpack.c.b16 %v792, %v791
    %v803 = vpack.c.b16 %v794, %v793
    %v804 = vpack.c.b16 %v796, %v795
    %813 = vmatprep.subr.bf16.mxu0 0
    %814 = vmatpush1.bf16.msra.mxu0 %v797
    %815 = vmatprep.subr.bf16.mxu0 0
    %816 = vmatpush1.bf16.msra.mxu0 %v798
    %817 = vmatprep.subr.bf16.mxu0 0
    %818 = vmatpush1.bf16.msra.mxu0 %v799
    %819 = vmatprep.subr.bf16.mxu0 0
    %820 = vmatpush1.bf16.msra.mxu0 %v800
    %821 = vmatprep.subr.bf16.mxu0 0
    %822 = vmatpush1.bf16.msra.mxu0 %v801
    %823 = vmatprep.subr.bf16.mxu0 0
    %824 = vmatpush1.bf16.msra.mxu0 %v802
    %825 = vmatprep.subr.bf16.mxu0 0
    %826 = vmatpush1.bf16.msra.mxu0 %v803
    %827 = vmatprep.subr.bf16.mxu0 0
    %828 = vmatpush1.bf16.msra.mxu0 %v804
    %829 = vmatprep.subr.bf16.mxu0 0
    %830 = vmatpush1.bf16.msra.mxu0 0
    %831 = vmatprep.subr.bf16.mxu0 0
    %832 = vmatpush1.bf16.msra.mxu0 0
    %833 = vmatprep.subr.bf16.mxu0 0
    %834 = vmatpush1.bf16.msra.mxu0 0
    %835 = vmatprep.subr.bf16.mxu0 0
    %836 = vmatpush1.bf16.msra.mxu0 0
    %837 = vmatprep.subr.bf16.mxu0 0
    %838 = vmatpush1.bf16.msra.mxu0 0
    %839 = vmatprep.subr.bf16.mxu0 0
    %840 = vmatpush1.bf16.msra.mxu0 0
    %841 = vmatprep.subr.bf16.mxu0 0
    %842 = vmatpush1.bf16.msra.mxu0 0
    %843 = vmatprep.subr.bf16.mxu0 0
    %844 = vmatpush1.bf16.msra.mxu0 0
    %845 = vmatprep.mubr.bf16.mxu0 0
    %846 = vmatmul.mubr.bf16.gmra.mrb[0].mxu0 %v749
    %v847 = vpop.f32.mrb[0].mxu0
    %v848 = vadd.f32 %v716, %v847
    %v849 = vpop.f32.mrb[0].mxu0
    %v850 = vpop.f32.mrb[0].mxu0
    %v851 = vadd.f32 %v716, %v850
    %v852 = vpop.f32.mrb[0].mxu0
    %853 = vmatprep.mubr.bf16.mxu0 0
    %854 = vmatmul.mubr.bf16.gmra.mrb[0].mxu0 %v750
    %v855 = vpop.f32.mrb[0].mxu0
    %v856 = vadd.f32 %v716, %v855
    %v857 = vpop.f32.mrb[0].mxu0
    %v858 = vpop.f32.mrb[0].mxu0
    %v859 = vadd.f32 %v716, %v858
    %v860 = vpop.f32.mrb[0].mxu0
    %861 = vmatprep.mubr.bf16.mxu0 0
    %862 = vmatmul.mubr.bf16.gmra.mrb[0].mxu0 %v751
    %v863 = vpop.f32.mrb[0].mxu0
    %v864 = vadd.f32 %v716, %v863
    %v865 = vpop.f32.mrb[0].mxu0
    %v866 = vpop.f32.mrb[0].mxu0
    %v867 = vadd.f32 %v716, %v866
    %v868 = vpop.f32.mrb[0].mxu0
    %869 = vmatprep.mubr.bf16.mxu0 0
    %870 = vmatmul.mubr.bf16.gmra.mrb[0].mxu0 %v752
    %v871 = vpop.f32.mrb[0].mxu0
    %v872 = vadd.f32 %v716, %v871
    %v873 = vpop.f32.mrb[0].mxu0
    %v874 = vpop.f32.mrb[0].mxu0
    %v875 = vadd.f32 %v716, %v874
    %v876 = vpop.f32.mrb[0].mxu0
    %877 = vmatprep.mubr.bf16.mxu0 0
    %878 = vmatmul.mubr.bf16.gmra.mrb[0].mxu0 %v753
    %v879 = vpop.f32.mrb[0].mxu0
    %v880 = vadd.f32 %v716, %v879
    %v881 = vpop.f32.mrb[0].mxu0
    %v882 = vpop.f32.mrb[0].mxu0
    %v883 = vadd.f32 %v716, %v882
    %v884 = vpop.f32.mrb[0].mxu0
    %885 = vmatprep.mubr.bf16.mxu0 0
    %886 = vmatmul.mubr.bf16.gmra.mrb[0].mxu0 %v754
    %v887 = vpop.f32.mrb[0].mxu0
    %v888 = vadd.f32 %v716, %v887
    %v889 = vpop.f32.mrb[0].mxu0
    %v890 = vpop.f32.mrb[0].mxu0
    %v891 = vadd.f32 %v716, %v890
    %v892 = vpop.f32.mrb[0].mxu0
    %893 = vmatprep.mubr.bf16.mxu0 0
    %894 = vmatmul.mubr.bf16.gmra.mrb[0].mxu0 %v755
    %v895 = vpop.f32.mrb[0].mxu0
    %v896 = vadd.f32 %v716, %v895
    %v897 = vpop.f32.mrb[0].mxu0
    %v898 = vpop.f32.mrb[0].mxu0
    %v899 = vadd.f32 %v716, %v898
    %v900 = vpop.f32.mrb[0].mxu0
    %901 = vmatprep.mubr.bf16.mxu0 0
    %902 = vmatmul.mubr.bf16.gmra.mrb[0].mxu0 %v756
    %v903 = vpop.f32.mrb[0].mxu0
    %v904 = vadd.f32 %v716, %v903
    %v905 = vpop.f32.mrb[0].mxu0
    %v906 = vpop.f32.mrb[0].mxu0
    %v907 = vadd.f32 %v716, %v906
    %v908 = vpop.f32.mrb[0].mxu0
    %909 = vdwg.mxu0
    %v910 = vmax.f32 %v848, 0.0
    %v911 = vmax.f32 %v851, 0.0
    %v912 = vmax.f32 %v856, 0.0
    %v913 = vmax.f32 %v859, 0.0
    %v914 = vmax.f32 %v864, 0.0
    %v915 = vmax.f32 %v867, 0.0
    %v916 = vmax.f32 %v872, 0.0
    %v917 = vmax.f32 %v875, 0.0
    %v918 = vmax.f32 %v880, 0.0
    %v919 = vmax.f32 %v883, 0.0
    %v920 = vmax.f32 %v888, 0.0
    %v921 = vmax.f32 %v891, 0.0
    %v922 = vmax.f32 %v896, 0.0
    %v923 = vmax.f32 %v899, 0.0
    %v924 = vmax.f32 %v904, 0.0
    %v925 = vmax.f32 %v907, 0.0
    %v926 = vpack.c.bf16 %v911, %v910
    %v927 = vpack.c.bf16 %v913, %v912
    %v928 = vpack.c.bf16 %v915, %v914
    %v929 = vpack.c.bf16 %v917, %v916
    %v930 = vpack.c.bf16 %v919, %v918
    %v931 = vpack.c.bf16 %v921, %v920
    %v932 = vpack.c.bf16 %v923, %v922
    %v933 = vpack.c.bf16 %v925, %v924
    %v934 = vld [vmem:[#allocation5 + $0x48] sm:$0xf]
    %v935 = vld [vmem:[#allocation5 + $0x4c] sm:$0xf]
    %v936 = vld [vmem:[#allocation5 + $0x50] sm:$0xf]
    %v937 = vld [vmem:[#allocation5 + $0x54] sm:$0xf]
    %v938 = vld [vmem:[#allocation5 + $0x58] sm:$0xf]
    %v939 = vld [vmem:[#allocation5 + $0x5c] sm:$0xf]
    %v940 = vld [vmem:[#allocation5 + $0x60] sm:$0xf]
    %v941 = vld [vmem:[#allocation5 + $0x64] sm:$0xf]
    %v942 = vld [vmem:[#allocation5 + $0x68] sm:$0xf]
    %v943 = vld [vmem:[#allocation5 + $0x6c] sm:$0xf]
    %v944 = vld [vmem:[#allocation5 + $0x70] sm:$0xf]
    %v945 = vld [vmem:[#allocation5 + $0x74] sm:$0xf]
    %v946 = vld [vmem:[#allocation5 + $0x78] sm:$0xf]
    %v947 = vld [vmem:[#allocation5 + $0x7c] sm:$0xf]
    %v948 = vld [vmem:[#allocation5 + $0x80] sm:$0xf]
    %v949 = vld [vmem:[#allocation5 + $0x84] sm:$0xf]
    %v950 = vld [vmem:[#allocation5 + $0x88] sm:$0x1]
    %v951 = vunpack.c.l.bf16 %v950
    %v952 = vlaneseq
    %v953 = vshrl.u32 %v952, 7
    %v954 = vsub.s32 0, %v953
    %v955 = vrot.slane %v951, %v954
    %v972 = vunpack.c.l.b16 %v934
    %v973 = vunpack.c.l.b16 %v935
    %v974 = vunpack.c.l.b16 %v936
    %v975 = vunpack.c.l.b16 %v937
    %v976 = vunpack.c.l.b16 %v938
    %v977 = vunpack.c.l.b16 %v939
    %v978 = vunpack.c.l.b16 %v940
    %v979 = vunpack.c.l.b16 %v941
    %v980 = vunpack.c.l.b16 %v942
    %v981 = vunpack.c.l.b16 %v943
    %v982 = vunpack.c.l.b16 %v944
    %v983 = vunpack.c.l.b16 %v945
    %v984 = vunpack.c.l.b16 %v946
    %v985 = vunpack.c.l.b16 %v947
    %v986 = vunpack.c.l.b16 %v948
    %v987 = vunpack.c.l.b16 %v949
    %v988 = vpack.c.b16 %v973, %v972
    %v989 = vpack.c.b16 %v975, %v974
    %v990 = vpack.c.b16 %v977, %v976
    %v991 = vpack.c.b16 %v979, %v978
    %v992 = vpack.c.b16 %v981, %v980
    %v993 = vpack.c.b16 %v983, %v982
    %v994 = vpack.c.b16 %v985, %v984
    %v995 = vpack.c.b16 %v987, %v986
    %1004 = vmatprep.subr.bf16.mxu0 0
    %1005 = vmatpush1.bf16.msra.mxu0 %v988
    %1006 = vmatprep.subr.bf16.mxu0 0
    %1007 = vmatpush1.bf16.msra.mxu0 %v989
    %1008 = vmatprep.subr.bf16.mxu0 0
    %1009 = vmatpush1.bf16.msra.mxu0 %v990
    %1010 = vmatprep.subr.bf16.mxu0 0
    %1011 = vmatpush1.bf16.msra.mxu0 %v991
    %1012 = vmatprep.subr.bf16.mxu0 0
    %1013 = vmatpush1.bf16.msra.mxu0 %v992
    %1014 = vmatprep.subr.bf16.mxu0 0
    %1015 = vmatpush1.bf16.msra.mxu0 %v993
    %1016 = vmatprep.subr.bf16.mxu0 0
    %1017 = vmatpush1.bf16.msra.mxu0 %v994
    %1018 = vmatprep.subr.bf16.mxu0 0
    %1019 = vmatpush1.bf16.msra.mxu0 %v995
    %1020 = vmatprep.subr.bf16.mxu0 0
    %1021 = vmatpush1.bf16.msra.mxu0 0
    %1022 = vmatprep.subr.bf16.mxu0 0
    %1023 = vmatpush1.bf16.msra.mxu0 0
    %1024 = vmatprep.subr.bf16.mxu0 0
    %1025 = vmatpush1.bf16.msra.mxu0 0
    %1026 = vmatprep.subr.bf16.mxu0 0
    %1027 = vmatpush1.bf16.msra.mxu0 0
    %1028 = vmatprep.subr.bf16.mxu0 0
    %1029 = vmatpush1.bf16.msra.mxu0 0
    %1030 = vmatprep.subr.bf16.mxu0 0
    %1031 = vmatpush1.bf16.msra.mxu0 0
    %1032 = vmatprep.subr.bf16.mxu0 0
    %1033 = vmatpush1.bf16.msra.mxu0 0
    %1034 = vmatprep.subr.bf16.mxu0 0
    %1035 = vmatpush1.bf16.msra.mxu0 0
    %1036 = vmatprep.mubr.bf16.mxu0 0
    %1037 = vmatmul.mubr.bf16.gmra.mrb[0].mxu0 %v926
    %v1038 = vpop.f32.mrb[0].mxu0
    %v1039 = vadd.f32 %v955, %v1038
    %v1040 = vpop.f32.mrb[0].mxu0
    %v1041 = vpop.f32.mrb[0].mxu0
    %v1042 = vadd.f32 %v955, %v1041
    %v1043 = vpop.f32.mrb[0].mxu0
    %1044 = vmatprep.mubr.bf16.mxu0 0
    %1045 = vmatmul.mubr.bf16.gmra.mrb[0].mxu0 %v927
    %v1046 = vpop.f32.mrb[0].mxu0
    %v1047 = vadd.f32 %v955, %v1046
    %v1048 = vpop.f32.mrb[0].mxu0
    %v1049 = vpop.f32.mrb[0].mxu0
    %v1050 = vadd.f32 %v955, %v1049
    %v1051 = vpop.f32.mrb[0].mxu0
    %1052 = vmatprep.mubr.bf16.mxu0 0
    %1053 = vmatmul.mubr.bf16.gmra.mrb[0].mxu0 %v928
    %v1054 = vpop.f32.mrb[0].mxu0
    %v1055 = vadd.f32 %v955, %v1054
    %v1056 = vpop.f32.mrb[0].mxu0
    %v1057 = vpop.f32.mrb[0].mxu0
    %v1058 = vadd.f32 %v955, %v1057
    %v1059 = vpop.f32.mrb[0].mxu0
    %1060 = vmatprep.mubr.bf16.mxu0 0
    %1061 = vmatmul.mubr.bf16.gmra.mrb[0].mxu0 %v929
    %v1062 = vpop.f32.mrb[0].mxu0
    %v1063 = vadd.f32 %v955, %v1062
    %v1064 = vpop.f32.mrb[0].mxu0
    %v1065 = vpop.f32.mrb[0].mxu0
    %v1066 = vadd.f32 %v955, %v1065
    %v1067 = vpop.f32.mrb[0].mxu0
    %1068 = vmatprep.mubr.bf16.mxu0 0
    %1069 = vmatmul.mubr.bf16.gmra.mrb[0].mxu0 %v930
    %v1070 = vpop.f32.mrb[0].mxu0
    %v1071 = vadd.f32 %v955, %v1070
    %v1072 = vpop.f32.mrb[0].mxu0
    %v1073 = vpop.f32.mrb[0].mxu0
    %v1074 = vadd.f32 %v955, %v1073
    %v1075 = vpop.f32.mrb[0].mxu0
    %1076 = vmatprep.mubr.bf16.mxu0 0
    %1077 = vmatmul.mubr.bf16.gmra.mrb[0].mxu0 %v931
    %v1078 = vpop.f32.mrb[0].mxu0
    %v1079 = vadd.f32 %v955, %v1078
    %v1080 = vpop.f32.mrb[0].mxu0
    %v1081 = vpop.f32.mrb[0].mxu0
    %v1082 = vadd.f32 %v955, %v1081
    %v1083 = vpop.f32.mrb[0].mxu0
    %1084 = vmatprep.mubr.bf16.mxu0 0
    %1085 = vmatmul.mubr.bf16.gmra.mrb[0].mxu0 %v932
    %v1086 = vpop.f32.mrb[0].mxu0
    %v1087 = vadd.f32 %v955, %v1086
    %v1088 = vpop.f32.mrb[0].mxu0
    %v1089 = vpop.f32.mrb[0].mxu0
    %v1090 = vadd.f32 %v955, %v1089
    %v1091 = vpop.f32.mrb[0].mxu0
    %1092 = vmatprep.mubr.bf16.mxu0 0
    %1093 = vmatmul.mubr.bf16.gmra.mrb[0].mxu0 %v933
    %v1094 = vpop.f32.mrb[0].mxu0
    %v1095 = vadd.f32 %v955, %v1094
    %v1096 = vpop.f32.mrb[0].mxu0
    %v1097 = vpop.f32.mrb[0].mxu0
    %v1098 = vadd.f32 %v955, %v1097
    %v1099 = vpop.f32.mrb[0].mxu0
    %1100 = vdwg.mxu0
    %v1101 = vmax.f32 %v1039, 0.0
    %v1102 = vmax.f32 %v1042, 0.0
    %v1103 = vmax.f32 %v1047, 0.0
    %v1104 = vmax.f32 %v1050, 0.0
    %v1105 = vmax.f32 %v1055, 0.0
    %v1106 = vmax.f32 %v1058, 0.0
    %v1107 = vmax.f32 %v1063, 0.0
    %v1108 = vmax.f32 %v1066, 0.0
    %v1109 = vmax.f32 %v1071, 0.0
    %v1110 = vmax.f32 %v1074, 0.0
    %v1111 = vmax.f32 %v1079, 0.0
    %v1112 = vmax.f32 %v1082, 0.0
    %v1113 = vmax.f32 %v1087, 0.0
    %v1114 = vmax.f32 %v1090, 0.0
    %v1115 = vmax.f32 %v1095, 0.0
    %v1116 = vmax.f32 %v1098, 0.0
    %v1117 = vpack.c.bf16 %v1102, %v1101
    %v1118 = vpack.c.bf16 %v1104, %v1103
    %v1119 = vpack.c.bf16 %v1106, %v1105
    %v1120 = vpack.c.bf16 %v1108, %v1107
    %v1121 = vpack.c.bf16 %v1110, %v1109
    %v1122 = vpack.c.bf16 %v1112, %v1111
    %v1123 = vpack.c.bf16 %v1114, %v1113
    %v1124 = vpack.c.bf16 %v1116, %v1115
    %v1125 = vld [vmem:[#allocation5 + $0x90] sm:$0xf]
    %v1126 = vld [vmem:[#allocation5 + $0x94] sm:$0xf]
    %v1127 = vld [vmem:[#allocation5 + $0x98] sm:$0xf]
    %v1128 = vld [vmem:[#allocation5 + $0x9c] sm:$0xf]
    %v1129 = vld [vmem:[#allocation5 + $0xa0] sm:$0xf]
    %v1130 = vld [vmem:[#allocation5 + $0xa4] sm:$0xf]
    %v1131 = vld [vmem:[#allocation5 + $0xa8] sm:$0xf]
    %v1132 = vld [vmem:[#allocation5 + $0xac] sm:$0xf]
    %v1133 = vld [vmem:[#allocation5 + $0xb0] sm:$0xf]
    %v1134 = vld [vmem:[#allocation5 + $0xb4] sm:$0xf]
    %v1135 = vld [vmem:[#allocation5 + $0xb8] sm:$0xf]
    %v1136 = vld [vmem:[#allocation5 + $0xbc] sm:$0xf]
    %v1137 = vld [vmem:[#allocation5 + $0xc0] sm:$0xf]
    %v1138 = vld [vmem:[#allocation5 + $0xc4] sm:$0xf]
    %v1139 = vld [vmem:[#allocation5 + $0xc8] sm:$0xf]
    %v1140 = vld [vmem:[#allocation5 + $0xcc] sm:$0xf]
    %v1141 = vld [vmem:[#allocation5 + $0xd0] sm:$0x1]
    %v1142 = vunpack.c.l.bf16 %v1141
    %v1143 = vlaneseq
    %v1144 = vshrl.u32 %v1143, 7
    %v1145 = vsub.s32 0, %v1144
    %v1146 = vrot.slane %v1142, %v1145
    %v1163 = vunpack.c.l.b16 %v1125
    %v1164 = vunpack.c.l.b16 %v1126
    %v1165 = vunpack.c.l.b16 %v1127
    %v1166 = vunpack.c.l.b16 %v1128
    %v1167 = vunpack.c.l.b16 %v1129
    %v1168 = vunpack.c.l.b16 %v1130
    %v1169 = vunpack.c.l.b16 %v1131
    %v1170 = vunpack.c.l.b16 %v1132
    %v1171 = vunpack.c.l.b16 %v1133
    %v1172 = vunpack.c.l.b16 %v1134
    %v1173 = vunpack.c.l.b16 %v1135
    %v1174 = vunpack.c.l.b16 %v1136
    %v1175 = vunpack.c.l.b16 %v1137
    %v1176 = vunpack.c.l.b16 %v1138
    %v1177 = vunpack.c.l.b16 %v1139
    %v1178 = vunpack.c.l.b16 %v1140
    %v1179 = vpack.c.b16 %v1164, %v1163
    %v1180 = vpack.c.b16 %v1166, %v1165
    %v1181 = vpack.c.b16 %v1168, %v1167
    %v1182 = vpack.c.b16 %v1170, %v1169
    %v1183 = vpack.c.b16 %v1172, %v1171
    %v1184 = vpack.c.b16 %v1174, %v1173
    %v1185 = vpack.c.b16 %v1176, %v1175
    %v1186 = vpack.c.b16 %v1178, %v1177
    %1195 = vmatprep.subr.bf16.mxu0 0
    %1196 = vmatpush1.bf16.msra.mxu0 %v1179
    %1197 = vmatprep.subr.bf16.mxu0 0
    %1198 = vmatpush1.bf16.msra.mxu0 %v1180
    %1199 = vmatprep.subr.bf16.mxu0 0
    %1200 = vmatpush1.bf16.msra.mxu0 %v1181
    %1201 = vmatprep.subr.bf16.mxu0 0
    %1202 = vmatpush1.bf16.msra.mxu0 %v1182
    %1203 = vmatprep.subr.bf16.mxu0 0
    %1204 = vmatpush1.bf16.msra.mxu0 %v1183
    %1205 = vmatprep.subr.bf16.mxu0 0
    %1206 = vmatpush1.bf16.msra.mxu0 %v1184
    %1207 = vmatprep.subr.bf16.mxu0 0
    %1208 = vmatpush1.bf16.msra.mxu0 %v1185
    %1209 = vmatprep.subr.bf16.mxu0 0
    %1210 = vmatpush1.bf16.msra.mxu0 %v1186
    %1211 = vmatprep.subr.bf16.mxu0 0
    %1212 = vmatpush1.bf16.msra.mxu0 0
    %1213 = vmatprep.subr.bf16.mxu0 0
    %1214 = vmatpush1.bf16.msra.mxu0 0
    %1215 = vmatprep.subr.bf16.mxu0 0
    %1216 = vmatpush1.bf16.msra.mxu0 0
    %1217 = vmatprep.subr.bf16.mxu0 0
    %1218 = vmatpush1.bf16.msra.mxu0 0
    %1219 = vmatprep.subr.bf16.mxu0 0
    %1220 = vmatpush1.bf16.msra.mxu0 0
    %1221 = vmatprep.subr.bf16.mxu0 0
    %1222 = vmatpush1.bf16.msra.mxu0 0
    %1223 = vmatprep.subr.bf16.mxu0 0
    %1224 = vmatpush1.bf16.msra.mxu0 0
    %1225 = vmatprep.subr.bf16.mxu0 0
    %1226 = vmatpush1.bf16.msra.mxu0 0
    %1227 = vmatprep.mubr.bf16.mxu0 0
    %1228 = vmatmul.mubr.bf16.gmra.mrb[0].mxu0 %v1117
    %v1229 = vpop.f32.mrb[0].mxu0
    %v1230 = vadd.f32 %v1146, %v1229
    %v1231 = vpop.f32.mrb[0].mxu0
    %v1232 = vpop.f32.mrb[0].mxu0
    %v1233 = vadd.f32 %v1146, %v1232
    %v1234 = vpop.f32.mrb[0].mxu0
    %1235 = vmatprep.mubr.bf16.mxu0 0
    %1236 = vmatmul.mubr.bf16.gmra.mrb[0].mxu0 %v1118
    %v1237 = vpop.f32.mrb[0].mxu0
    %v1238 = vadd.f32 %v1146, %v1237
    %v1239 = vpop.f32.mrb[0].mxu0
    %v1240 = vpop.f32.mrb[0].mxu0
    %v1241 = vadd.f32 %v1146, %v1240
    %v1242 = vpop.f32.mrb[0].mxu0
    %1243 = vmatprep.mubr.bf16.mxu0 0
    %1244 = vmatmul.mubr.bf16.gmra.mrb[0].mxu0 %v1119
    %v1245 = vpop.f32.mrb[0].mxu0
    %v1246 = vadd.f32 %v1146, %v1245
    %v1247 = vpop.f32.mrb[0].mxu0
    %v1248 = vpop.f32.mrb[0].mxu0
    %v1249 = vadd.f32 %v1146, %v1248
    %v1250 = vpop.f32.mrb[0].mxu0
    %1251 = vmatprep.mubr.bf16.mxu0 0
    %1252 = vmatmul.mubr.bf16.gmra.mrb[0].mxu0 %v1120
    %v1253 = vpop.f32.mrb[0].mxu0
    %v1254 = vadd.f32 %v1146, %v1253
    %v1255 = vpop.f32.mrb[0].mxu0
    %v1256 = vpop.f32.mrb[0].mxu0
    %v1257 = vadd.f32 %v1146, %v1256
    %v1258 = vpop.f32.mrb[0].mxu0
    %1259 = vmatprep.mubr.bf16.mxu0 0
    %1260 = vmatmul.mubr.bf16.gmra.mrb[0].mxu0 %v1121
    %v1261 = vpop.f32.mrb[0].mxu0
    %v1262 = vadd.f32 %v1146, %v1261
    %v1263 = vpop.f32.mrb[0].mxu0
    %v1264 = vpop.f32.mrb[0].mxu0
    %v1265 = vadd.f32 %v1146, %v1264
    %v1266 = vpop.f32.mrb[0].mxu0
    %1267 = vmatprep.mubr.bf16.mxu0 0
    %1268 = vmatmul.mubr.bf16.gmra.mrb[0].mxu0 %v1122
    %v1269 = vpop.f32.mrb[0].mxu0
    %v1270 = vadd.f32 %v1146, %v1269
    %v1271 = vpop.f32.mrb[0].mxu0
    %v1272 = vpop.f32.mrb[0].mxu0
    %v1273 = vadd.f32 %v1146, %v1272
    %v1274 = vpop.f32.mrb[0].mxu0
    %1275 = vmatprep.mubr.bf16.mxu0 0
    %1276 = vmatmul.mubr.bf16.gmra.mrb[0].mxu0 %v1123
    %v1277 = vpop.f32.mrb[0].mxu0
    %v1278 = vadd.f32 %v1146, %v1277
    %v1279 = vpop.f32.mrb[0].mxu0
    %v1280 = vpop.f32.mrb[0].mxu0
    %v1281 = vadd.f32 %v1146, %v1280
    %v1282 = vpop.f32.mrb[0].mxu0
    %1283 = vmatprep.mubr.bf16.mxu0 0
    %1284 = vmatmul.mubr.bf16.gmra.mrb[0].mxu0 %v1124
    %v1285 = vpop.f32.mrb[0].mxu0
    %v1286 = vadd.f32 %v1146, %v1285
    %v1287 = vpop.f32.mrb[0].mxu0
    %v1288 = vpop.f32.mrb[0].mxu0
    %v1289 = vadd.f32 %v1146, %v1288
    %v1290 = vpop.f32.mrb[0].mxu0
    %1291 = vdwg.mxu0
    %v1292 = vpack.c.bf16 %v1233, %v1230
    %v1293 = vpack.c.bf16 %v1241, %v1238
    %v1294 = vpack.c.bf16 %v1249, %v1246
    %v1295 = vpack.c.bf16 %v1257, %v1254
    %v1296 = vpack.c.bf16 %v1265, %v1262
    %v1297 = vpack.c.bf16 %v1273, %v1270
    %v1298 = vpack.c.bf16 %v1281, %v1278
    %v1299 = vpack.c.bf16 %v1289, %v1286
    %v1300 = vld [vmem:[#allocation2] sm:$0xff]
    %v1301 = vld [vmem:[#allocation2 + $0x8] sm:$0xff]
    %v1302 = vld [vmem:[#allocation2 + $0x10] sm:$0xff]
    %v1303 = vld [vmem:[#allocation2 + $0x18] sm:$0xff]
    %v1304 = vld [vmem:[#allocation2 + $0x20] sm:$0xff]
    %v1305 = vld [vmem:[#allocation2 + $0x28] sm:$0xff]
    %v1306 = vld [vmem:[#allocation2 + $0x30] sm:$0xff]
    %v1307 = vld [vmem:[#allocation2 + $0x38] sm:$0xff]
    %1308 = vmatprep.subr.bf16.mxu0 0
    %1309 = vmatpush1.bf16.xpose.msra.mxu0 %v1292
    %1310 = vmatprep.subr.bf16.mxu0 0
    %1311 = vmatpush1.bf16.xpose.msra.mxu0 %v1293
    %1312 = vmatprep.subr.bf16.mxu0 0
    %1313 = vmatpush1.bf16.xpose.msra.mxu0 %v1294
    %1314 = vmatprep.subr.bf16.mxu0 0
    %1315 = vmatpush1.bf16.xpose.msra.mxu0 %v1295
    %1316 = vmatprep.subr.bf16.mxu0 0
    %1317 = vmatpush1.bf16.xpose.msra.mxu0 %v1296
    %1318 = vmatprep.subr.bf16.mxu0 0
    %1319 = vmatpush1.bf16.xpose.msra.mxu0 %v1297
    %1320 = vmatprep.subr.bf16.mxu0 0
    %1321 = vmatpush1.bf16.xpose.msra.mxu0 %v1298
    %1322 = vmatprep.subr.bf16.mxu0 0
    %1323 = vmatpush1.bf16.xpose.msra.mxu0 %v1299
    %1324 = vmatprep.subr.bf16.mxu0 0
    %1325 = vmatpush1.bf16.xpose.msra.mxu0 0
    %1326 = vmatprep.subr.bf16.mxu0 0
    %1327 = vmatpush1.bf16.xpose.msra.mxu0 0
    %1328 = vmatprep.subr.bf16.mxu0 0
    %1329 = vmatpush1.bf16.xpose.msra.mxu0 0
    %1330 = vmatprep.subr.bf16.mxu0 0
    %1331 = vmatpush1.bf16.xpose.msra.mxu0 0
    %1332 = vmatprep.subr.bf16.mxu0 0
    %1333 = vmatpush1.bf16.xpose.msra.mxu0 0
    %1334 = vmatprep.subr.bf16.mxu0 0
    %1335 = vmatpush1.bf16.xpose.msra.mxu0 0
    %1336 = vmatprep.subr.bf16.mxu0 0
    %1337 = vmatpush1.bf16.xpose.msra.mxu0 0
    %1338 = vmatprep.subr.bf16.mxu0 0
    %1339 = vmatpush1.bf16.xpose.msra.mxu0 0
    %1340 = vmatprep.mubr.bf16.mxu0 0
    %1341 = vmatmul.mubr.bf16.gmra.mrb[0].mxu0 %v1300
    %v1342 = vpop.f32.mrb[0].mxu0
    %v1343 = vadd.f32 0.0, %v1342
    %v1344 = vpop.f32.mrb[0].mxu0
    %v1345 = vpop.f32.mrb[0].mxu0
    %v1346 = vadd.f32 0.0, %v1345
    %v1347 = vpop.f32.mrb[0].mxu0
    %1348 = vmatprep.mubr.bf16.mxu0 0
    %1349 = vmatmul.mubr.bf16.gmra.mrb[0].mxu0 %v1301
    %v1350 = vpop.f32.mrb[0].mxu0
    %v1351 = vadd.f32 0.0, %v1350
    %v1352 = vpop.f32.mrb[0].mxu0
    %v1353 = vpop.f32.mrb[0].mxu0
    %v1354 = vadd.f32 0.0, %v1353
    %v1355 = vpop.f32.mrb[0].mxu0
    %1356 = vmatprep.mubr.bf16.mxu0 0
    %1357 = vmatmul.mubr.bf16.gmra.mrb[0].mxu0 %v1302
    %v1358 = vpop.f32.mrb[0].mxu0
    %v1359 = vadd.f32 0.0, %v1358
    %v1360 = vpop.f32.mrb[0].mxu0
    %v1361 = vpop.f32.mrb[0].mxu0
    %v1362 = vadd.f32 0.0, %v1361
    %v1363 = vpop.f32.mrb[0].mxu0
    %1364 = vmatprep.mubr.bf16.mxu0 0
    %1365 = vmatmul.mubr.bf16.gmra.mrb[0].mxu0 %v1303
    %v1366 = vpop.f32.mrb[0].mxu0
    %v1367 = vadd.f32 0.0, %v1366
    %v1368 = vpop.f32.mrb[0].mxu0
    %v1369 = vpop.f32.mrb[0].mxu0
    %v1370 = vadd.f32 0.0, %v1369
    %v1371 = vpop.f32.mrb[0].mxu0
    %1372 = vmatprep.mubr.bf16.mxu0 0
    %1373 = vmatmul.mubr.bf16.gmra.mrb[0].mxu0 %v1304
    %v1374 = vpop.f32.mrb[0].mxu0
    %v1375 = vadd.f32 0.0, %v1374
    %v1376 = vpop.f32.mrb[0].mxu0
    %v1377 = vpop.f32.mrb[0].mxu0
    %v1378 = vadd.f32 0.0, %v1377
    %v1379 = vpop.f32.mrb[0].mxu0
    %1380 = vmatprep.mubr.bf16.mxu0 0
    %1381 = vmatmul.mubr.bf16.gmra.mrb[0].mxu0 %v1305
    %v1382 = vpop.f32.mrb[0].mxu0
    %v1383 = vadd.f32 0.0, %v1382
    %v1384 = vpop.f32.mrb[0].mxu0
    %v1385 = vpop.f32.mrb[0].mxu0
    %v1386 = vadd.f32 0.0, %v1385
    %v1387 = vpop.f32.mrb[0].mxu0
    %1388 = vmatprep.mubr.bf16.mxu0 0
    %1389 = vmatmul.mubr.bf16.gmra.mrb[0].mxu0 %v1306
    %v1390 = vpop.f32.mrb[0].mxu0
    %v1391 = vadd.f32 0.0, %v1390
    %v1392 = vpop.f32.mrb[0].mxu0
    %v1393 = vpop.f32.mrb[0].mxu0
    %v1394 = vadd.f32 0.0, %v1393
    %v1395 = vpop.f32.mrb[0].mxu0
    %1396 = vmatprep.mubr.bf16.mxu0 0
    %1397 = vmatmul.mubr.bf16.gmra.mrb[0].mxu0 %v1307
    %v1398 = vpop.f32.mrb[0].mxu0
    %v1399 = vadd.f32 0.0, %v1398
    %v1400 = vpop.f32.mrb[0].mxu0
    %v1401 = vpop.f32.mrb[0].mxu0
    %v1402 = vadd.f32 0.0, %v1401
    %v1403 = vpop.f32.mrb[0].mxu0
    %1404 = vdwg.mxu0
    %1405 = vst [vmem:[%s4] sm:$0xff] %v1343
    %1406 = vst [vmem:[%s4 + $0x8] sm:$0xff] %v1346
    %1407 = vst [vmem:[%s4 + $0x10] sm:$0xff] %v1351
    %1408 = vst [vmem:[%s4 + $0x18] sm:$0xff] %v1354
    %1409 = vst [vmem:[%s4 + $0x20] sm:$0xff] %v1359
    %1410 = vst [vmem:[%s4 + $0x28] sm:$0xff] %v1362
    %1411 = vst [vmem:[%s4 + $0x30] sm:$0xff] %v1367
    %1412 = vst [vmem:[%s4 + $0x38] sm:$0xff] %v1370
    %1413 = vst [vmem:[%s4 + $0x40] sm:$0xff] %v1375
    %1414 = vst [vmem:[%s4 + $0x48] sm:$0xff] %v1378
    %1415 = vst [vmem:[%s4 + $0x50] sm:$0xff] %v1383
    %1416 = vst [vmem:[%s4 + $0x58] sm:$0xff] %v1386
    %1417 = vst [vmem:[%s4 + $0x60] sm:$0xff] %v1391
    %1418 = vst [vmem:[%s4 + $0x68] sm:$0xff] %v1394
    %1419 = vst [vmem:[%s4 + $0x70] sm:$0xff] %v1399
    %1420 = vst [vmem:[%s4 + $0x78] sm:$0xff] %v1402
    // Predicated region
    $region30: #{separable_critic.1} parent=1 // pred_check
      _
    $region31: #{separable_critic.1} parent=1 // pred_check_branch
      %1422 = sbr.rel (0) target = $region33
    $region32: #{separable_critic.1} parent=1 // pred_region
      _
    $region33: #{separable_critic.1} parent=1 // pred_fallthru
      _
    // Predicated region
    $region34: #{separable_critic.1} parent=1 // pred_check
      _
    $region35: #{separable_critic.1} parent=1 // pred_check_branch
      %1424 = sbr.rel (0) target = $region37
    $region36: #{separable_critic.1} parent=1 // pred_region
      _
    $region37: #{separable_critic.1} parent=1 // pred_fallthru
      _
    %1425 = vsyncpa [#allocation4], 1
    %1426 = vsyncpa [#allocation6], 1

</llo_original>
